<compile_context>
chip_gen: v7x
topology: tpu7x:2x2x1
jax: 0.10.0
libtpu: 0.0.40
codegen_flags: <defaults>
</compile_context>

<pallas_src>
import functools

import jax
import jax.numpy as jnp
from jax.experimental import pallas as pl
from jax.experimental.pallas import tpu as pltpu

PAD_TOKEN_ID = 0
LN_EPS = 1e-12
VMEM_LIMIT = 48 * 1024 * 1024  # sized for v7x's 64 MiB physical VMEM with headroom

VMEM_SPEC = functools.partial(pl.BlockSpec, memory_space=pltpu.MemorySpace.VMEM)


def _row_tile(n):
    """Largest row tile (multiple of 8, <=1024) dividing n, else the full dim."""
    for t in (1024, 512, 256, 128, 64, 32, 16, 8):
        if n % t == 0:
            return t
    return n


# ----------------------------- Pallas kernels ------------------------------ #

def _layernorm_kernel(x_ref, g_ref, b_ref, o_ref, *, eps):
    x = x_ref[...]                                           # [TM, H] f32
    mu = jnp.mean(x, axis=-1, keepdims=True)
    var = jnp.mean(jnp.square(x - mu), axis=-1, keepdims=True)
    o_ref[...] = (x - mu) * jax.lax.rsqrt(var + eps) * g_ref[...] + b_ref[...]


def _attn_block_kernel(x_ref, wqkv_ref, bqkv_ref, wo_ref, bo_ref, g_ref, b_ref,
                       bias_ref, o_ref, *, nh, dh, eps):
    """Fused: QKV proj -> per-head attention -> O proj -> residual -> LN1.

    One grid step == one batch element.  Weights are bf16 and VMEM-resident
    across the whole grid (constant index_map); accumulation is f32.
    """
    H = nh * dh
    x = x_ref[0]                                             # [S, H] f32
    xb = x.astype(jnp.bfloat16)

    # fused QKV projection: one MXU pass over x
    qkv = jnp.dot(xb, wqkv_ref[...],
                  preferred_element_type=jnp.float32) + bqkv_ref[...]   # [S, 3H]

    bias = bias_ref[0]                                       # [1, S] additive mask bias
    scale = 1.0 / (dh ** 0.5)

    # per-head attention; heads split in-kernel (no HBM transposes)
    # TODO(synk): for non-toy S convert to a flash-style online-softmax loop over
    # KV blocks instead of forming the dense [S, S] score tile.
    ctx_heads = []
    for h in range(nh):
        qh = qkv[:, h * dh:(h + 1) * dh].astype(jnp.bfloat16)
        kh = qkv[:, H + h * dh:H + (h + 1) * dh].astype(jnp.bfloat16)
        vh = qkv[:, 2 * H + h * dh:2 * H + (h + 1) * dh].astype(jnp.bfloat16)
        s = jnp.einsum("qd,kd->qk", qh, kh,
                       preferred_element_type=jnp.float32) * scale      # [S, S]
        s = s + bias
        s = s - jnp.max(s, axis=-1, keepdims=True)
        p = jnp.exp(s)
        p = p * pl.reciprocal(jnp.sum(p, axis=-1, keepdims=True), approx=True)
        ctx_heads.append(jnp.dot(p.astype(jnp.bfloat16), vh,
                                 preferred_element_type=jnp.float32))   # [S, dh]
    ctx = jnp.concatenate(ctx_heads, axis=-1)                # [S, H] f32

    attn_out = jnp.dot(ctx.astype(jnp.bfloat16), wo_ref[...],
                       preferred_element_type=jnp.float32) + bo_ref[...]
    y = attn_out + x                                         # residual (f32)
    mu = jnp.mean(y, axis=-1, keepdims=True)
    var = jnp.mean(jnp.square(y - mu), axis=-1, keepdims=True)
    o_ref[0] = (y - mu) * jax.lax.rsqrt(var + eps) * g_ref[...] + b_ref[...]


def _ffn_block_kernel(x_ref, w1_ref, b1_ref, w2_ref, b2_ref, g_ref, b_ref, o_ref,
                      *, eps):
    """Fused: FF1 + GELU + FF2 + residual + LN2. Intermediate stays in VMEM."""
    x = x_ref[...]                                           # [TM, H] f32
    h = jnp.dot(x.astype(jnp.bfloat16), w1_ref[...],
                preferred_element_type=jnp.float32) + b1_ref[...]       # [TM, I]
    # TODO(synk): HF Electra default act is exact (erf) GELU; tanh approx used for robust lowering.
    h = jax.nn.gelu(h, approximate=True)
    ff = jnp.dot(h.astype(jnp.bfloat16), w2_ref[...],
                 preferred_element_type=jnp.float32) + b2_ref[...]      # [TM, H]
    y = ff + x
    mu = jnp.mean(y, axis=-1, keepdims=True)
    var = jnp.mean(jnp.square(y - mu), axis=-1, keepdims=True)
    o_ref[...] = (y - mu) * jax.lax.rsqrt(var + eps) * g_ref[...] + b_ref[...]


def _detector_loss_kernel(x_ref, w_ref, b_ref, mask_ref, y_ref, logits_ref, loss_ref):
    # detector: Linear(H, 1) as a lane reduction -> [B*S, 1], plus the masked
    # BCEWithLogits 'mean' loss over active tokens.
    # TODO(synk): at production shapes fuse this into the last FFN layer's
    # epilogue and emit lane-dense [rows, 128] logits blocks.
    x = x_ref[...]                                           # [BS, H]
    w = w_ref[...]                                           # [1,  H]
    z = jnp.sum(x * w, axis=-1, keepdims=True) + b_ref[...]  # [BS, 1]
    logits_ref[...] = z
    y = y_ref[...]
    m = mask_ref[...]
    per_tok = jnp.maximum(z, 0.0) - z * y + jnp.log1p(jnp.exp(-jnp.abs(z)))
    num = jnp.sum(per_tok * m, axis=(0, 1), keepdims=True)
    den = jnp.sum(m, axis=(0, 1), keepdims=True)
    loss_ref[...] = num / den


# ------------------------------ kernel wrappers ----------------------------- #

def layernorm(x, gamma, beta):
    M, H = x.shape
    tm = _row_tile(M)
    return pl.pallas_call(
        functools.partial(_layernorm_kernel, eps=LN_EPS),
        out_shape=jax.ShapeDtypeStruct((M, H), jnp.float32),
        grid=(M // tm,),
        in_specs=[pl.BlockSpec((tm, H), lambda i: (i, 0)),
                  pl.BlockSpec((1, H), lambda i: (0, 0)),
                  pl.BlockSpec((1, H), lambda i: (0, 0))],
        out_specs=pl.BlockSpec((tm, H), lambda i: (i, 0)),
        compiler_params=pltpu.CompilerParams(
            dimension_semantics=("parallel",), vmem_limit_bytes=VMEM_LIMIT),
    )(x, gamma, beta)


def attention_block(x3, bias3, lp, *, nh, dh):
    B, S, H = x3.shape
    return pl.pallas_call(
        functools.partial(_attn_block_kernel, nh=nh, dh=dh, eps=LN_EPS),
        out_shape=jax.ShapeDtypeStruct((B, S, H), jnp.float32),
        grid=(B,),
        in_specs=[pl.BlockSpec((1, S, H), lambda b: (b, 0, 0)),     # x
                  pl.BlockSpec((H, 3 * H), lambda b: (0, 0)),       # Wqkv (bf16, resident)
                  pl.BlockSpec((1, 3 * H), lambda b: (0, 0)),       # bqkv
                  pl.BlockSpec((H, H), lambda b: (0, 0)),           # Wo   (bf16, resident)
                  pl.BlockSpec((1, H), lambda b: (0, 0)),           # bo
                  pl.BlockSpec((1, H), lambda b: (0, 0)),           # LN1 gamma
                  pl.BlockSpec((1, H), lambda b: (0, 0)),           # LN1 beta
                  pl.BlockSpec((1, 1, S), lambda b: (b, 0, 0))],    # mask bias row
        out_specs=pl.BlockSpec((1, S, H), lambda b: (b, 0, 0)),
        compiler_params=pltpu.CompilerParams(
            dimension_semantics=("parallel",), vmem_limit_bytes=VMEM_LIMIT),
    )(x3, lp["wqkv"], lp["bqkv"], lp["o_w"], lp["o_b"], lp["ln1_g"], lp["ln1_b"],
      bias3)


def ffn_block(x, lp):
    M, H = x.shape
    I = lp["ff1_w"].shape[1]
    tm = _row_tile(M)
    return pl.pallas_call(
        functools.partial(_ffn_block_kernel, eps=LN_EPS),
        out_shape=jax.ShapeDtypeStruct((M, H), jnp.float32),
        grid=(M // tm,),
        in_specs=[pl.BlockSpec((tm, H), lambda i: (i, 0)),          # x
                  pl.BlockSpec((H, I), lambda i: (0, 0)),           # W1 (bf16, resident)
                  pl.BlockSpec((1, I), lambda i: (0, 0)),           # b1
                  pl.BlockSpec((I, H), lambda i: (0, 0)),           # W2 (bf16, resident)
                  pl.BlockSpec((1, H), lambda i: (0, 0)),           # b2
                  pl.BlockSpec((1, H), lambda i: (0, 0)),           # LN2 gamma
                  pl.BlockSpec((1, H), lambda i: (0, 0))],          # LN2 beta
        out_specs=pl.BlockSpec((tm, H), lambda i: (i, 0)),
        compiler_params=pltpu.CompilerParams(
            dimension_semantics=("parallel",), vmem_limit_bytes=VMEM_LIMIT),
    )(x, lp["ff1_w"], lp["ff1_b"], lp["ff2_w"], lp["ff2_b"], lp["ln2_g"], lp["ln2_b"])


def detector_and_loss(x, w_row, b, mask_f, labels_f):
    BS = x.shape[0]
    return pl.pallas_call(
        _detector_loss_kernel,
        out_shape=(jax.ShapeDtypeStruct((BS, 1), jnp.float32),
                   jax.ShapeDtypeStruct((1, 1), jnp.float32)),
        in_specs=[VMEM_SPEC(), VMEM_SPEC(), VMEM_SPEC(), VMEM_SPEC(), VMEM_SPEC()],
        out_specs=(VMEM_SPEC(), VMEM_SPEC()),
    )(x, w_row, b, mask_f, labels_f)


# --------------------------- model glue (plain JAX) ------------------------- #

def init_params(key, vocab, max_pos, type_vocab, H, n_layers, inter):
    def dense(k, fi, fo):
        # matmul weights kept in bf16 (MXU operands); f32 accumulation in-kernel
        return (0.02 * jax.random.normal(k, (fi, fo), jnp.float32)).astype(jnp.bfloat16)

    keys = jax.random.split(key, 4 + n_layers)
    params = {
        "word_emb": 0.02 * jax.random.normal(keys[0], (vocab, H), jnp.float32),
        "pos_emb": 0.02 * jax.random.normal(keys[1], (max_pos, H), jnp.float32),
        "type_emb": 0.02 * jax.random.normal(keys[2], (type_vocab, H), jnp.float32),
        "emb_ln_g": jnp.ones((1, H), jnp.float32),
        "emb_ln_b": jnp.zeros((1, H), jnp.float32),
        "det_w": 0.02 * jax.random.normal(keys[3], (1, H), jnp.float32),  # Linear(H,1) row
        "det_b": jnp.zeros((1, 1), jnp.float32),
        "layers": [],
    }
    for l in range(n_layers):
        ks = jax.random.split(keys[4 + l], 6)
        q_w, k_w, v_w = dense(ks[0], H, H), dense(ks[1], H, H), dense(ks[2], H, H)
        params["layers"].append({
            "wqkv": jnp.concatenate([q_w, k_w, v_w], axis=1),      # [H, 3H] bf16
            "bqkv": jnp.zeros((1, 3 * H), jnp.float32),
            "o_w": dense(ks[3], H, H), "o_b": jnp.zeros((1, H), jnp.float32),
            "ff1_w": dense(ks[4], H, inter), "ff1_b": jnp.zeros((1, inter), jnp.float32),
            "ff2_w": dense(ks[5], inter, H), "ff2_b": jnp.zeros((1, H), jnp.float32),
            "ln1_g": jnp.ones((1, H), jnp.float32), "ln1_b": jnp.zeros((1, H), jnp.float32),
            "ln2_g": jnp.ones((1, H), jnp.float32), "ln2_b": jnp.zeros((1, H), jnp.float32),
        })
    return params


def electra_for_spelling_check(params, input_ids, attention_mask=None,
                               token_type_ids=None, labels=None, num_heads=2):
    B, S = input_ids.shape
    H = params["word_emb"].shape[1]
    nh = num_heads
    dh = H // nh
    BS = B * S

    # attention_mask = ones; zero where input_ids == pad_token_id (as in the module)
    if attention_mask is None:
        attention_mask = jnp.where(input_ids == PAD_TOKEN_ID, 0, 1).astype(jnp.int32)
    if token_type_ids is None:
        token_type_ids = jnp.zeros_like(input_ids)

    # embeddings (gather is glue; LN runs in a Pallas kernel, no zero residual)
    pos_ids = jnp.arange(S)
    emb = (params["word_emb"][input_ids]
           + params["pos_emb"][pos_ids][None, :, :]
           + params["type_emb"][token_type_ids]).astype(jnp.float32)
    x = layernorm(emb.reshape(BS, H), params["emb_ln_g"], params["emb_ln_b"])

    # additive attention bias row per batch: 0 for real tokens, -1e9 for pads.
    # Broadcast over heads/query rows happens inside the kernel (no [B*nh,S,S] tensor).
    mask_f = attention_mask.astype(jnp.float32)                 # [B, S]
    attn_bias = ((1.0 - mask_f) * jnp.float32(-1e9)).reshape(B, 1, S)

    for lp in params["layers"]:
        x = attention_block(x.reshape(B, S, H), attn_bias, lp, nh=nh, dh=dh)
        x = ffn_block(x.reshape(BS, H), lp)

    mask_col = mask_f.reshape(BS, 1)
    labels_col = (labels.astype(jnp.float32) if labels is not None
                  else jnp.zeros_like(input_ids, jnp.float32)).reshape(BS, 1)

    logits_2d, loss_11 = detector_and_loss(x, params["det_w"], params["det_b"],
                                           mask_col, labels_col)
    logits = logits_2d.reshape(B, S)          # == detector(seq_out).squeeze(-1)

    # TODO(synk): only the default loss_type='bce' path is implemented
    # ('focal'/'lsr' variants of the reference module are not exercised here).
    if labels is not None:
        return loss_11[0, 0], logits
    return logits


# ----------------------------------- main ----------------------------------- #

if __name__ == "__main__":
    B, S, H = 2, 8, 32
    N_HEADS, N_LAYERS, INTER = 2, 2, 64
    VOCAB, TYPE_VOCAB, MAX_POS = 100, 2, 16

    key = jax.random.PRNGKey(0)
    k_params, k_ids, k_labels = jax.random.split(key, 3)

    params = init_params(k_params, VOCAB, MAX_POS, TYPE_VOCAB, H, N_LAYERS, INTER)

    input_ids = jax.random.randint(k_ids, (B, S), 1, VOCAB, dtype=jnp.int32)
    input_ids = input_ids.at[:, -2:].set(PAD_TOKEN_ID)   # some padding at the tail
    labels = jax.random.randint(k_labels, (B, S), 0, 2, dtype=jnp.int32)

    fwd = jax.jit(functools.partial(electra_for_spelling_check, num_heads=N_HEADS))
    loss, logits = fwd(params, input_ids, labels=labels)
    jax.block_until_ready((loss, logits))
    assert logits.shape == (B, S) and loss.shape == ()
    print("KERNEL_OK")
</pallas_src>

<mosaic_0001>
module attributes {stable_mosaic.version = 11 : i64} {
  func.func @_layernorm_kernel(%arg0: i32, %arg1: memref<16x32xf32, #tpu.memory_space<vmem>>, %arg2: memref<1x32xf32, #tpu.memory_space<vmem>>, %arg3: memref<1x32xf32, #tpu.memory_space<vmem>>, %arg4: memref<16x32xf32, #tpu.memory_space<vmem>>) attributes {dimension_semantics = [#tpu.dimension_semantics<parallel>], iteration_bounds = array<i64: 1>, scalar_prefetch = 0 : i64, scratch_operands = 0 : i64, tpu.core_type = #tpu.core_type<tc>, window_params = [{transform_indices = @transform_0, window_bounds = array<i64: 16, 32>}, {pipeline_mode = #tpu.pipeline_mode<synchronous>, transform_indices = @transform_1, window_bounds = array<i64: 1, 32>}, {pipeline_mode = #tpu.pipeline_mode<synchronous>, transform_indices = @transform_2, window_bounds = array<i64: 1, 32>}, {transform_indices = @transform_3, window_bounds = array<i64: 16, 32>}]} {
    %c0 = arith.constant 0 : index
    %c0_0 = arith.constant 0 : index
    %0 = vector.load %arg1[%c0, %c0_0] : memref<16x32xf32, #tpu.memory_space<vmem>>, vector<16x32xf32>
    %cst = arith.constant dense<0.000000e+00> : vector<16xf32>
    %1 = vector.multi_reduction <add>, %0, %cst [1] : vector<16x32xf32> to vector<16xf32>
    %2 = vector.shape_cast %1 : vector<16xf32> to vector<16x1xf32>
    %cst_1 = arith.constant 3.200000e+01 : f32
    %3 = vector.broadcast %cst_1 : f32 to vector<16x1xf32>
    %4 = arith.divf %2, %3 : vector<16x1xf32>
    %5 = vector.broadcast %4 : vector<16x1xf32> to vector<16x32xf32>
    %6 = arith.subf %0, %5 : vector<16x32xf32>
    %7 = arith.mulf %6, %6 : vector<16x32xf32>
    %cst_2 = arith.constant dense<0.000000e+00> : vector<16xf32>
    %8 = vector.multi_reduction <add>, %7, %cst_2 [1] : vector<16x32xf32> to vector<16xf32>
    %9 = vector.shape_cast %8 : vector<16xf32> to vector<16x1xf32>
    %cst_3 = arith.constant 3.200000e+01 : f32
    %10 = vector.broadcast %cst_3 : f32 to vector<16x1xf32>
    %11 = arith.divf %9, %10 : vector<16x1xf32>
    %12 = vector.broadcast %4 : vector<16x1xf32> to vector<16x32xf32>
    %13 = arith.subf %0, %12 : vector<16x32xf32>
    %cst_4 = arith.constant 9.99999996E-13 : f32
    %14 = vector.broadcast %cst_4 : f32 to vector<16x1xf32>
    %15 = arith.addf %11, %14 : vector<16x1xf32>
    %16 = math.rsqrt %15 : vector<16x1xf32>
    %17 = vector.broadcast %16 : vector<16x1xf32> to vector<16x32xf32>
    %18 = arith.mulf %13, %17 : vector<16x32xf32>
    %c0_5 = arith.constant 0 : index
    %c0_6 = arith.constant 0 : index
    %19 = vector.load %arg2[%c0_5, %c0_6] : memref<1x32xf32, #tpu.memory_space<vmem>>, vector<1x32xf32>
    %20 = vector.broadcast %19 : vector<1x32xf32> to vector<16x32xf32>
    %21 = arith.mulf %18, %20 : vector<16x32xf32>
    %c0_7 = arith.constant 0 : index
    %c0_8 = arith.constant 0 : index
    %22 = vector.load %arg3[%c0_7, %c0_8] : memref<1x32xf32, #tpu.memory_space<vmem>>, vector<1x32xf32>
    %23 = vector.broadcast %22 : vector<1x32xf32> to vector<16x32xf32>
    %24 = arith.addf %21, %23 : vector<16x32xf32>
    %c0_9 = arith.constant 0 : index
    %c0_10 = arith.constant 0 : index
    %25 = vector.load %arg4[%c0_9, %c0_10] : memref<16x32xf32, #tpu.memory_space<vmem>>, vector<16x32xf32>
    tpu.vector_store %arg4[%c0_9, %c0_10], %24 {strides = array<i32>} : memref<16x32xf32, #tpu.memory_space<vmem>>, vector<16x32xf32>,
    return
  }
  func.func @transform_0(%arg0: i32) -> (i32, i32) {
    %c0_i32 = arith.constant 0 : i32
    %c0_i32_0 = arith.constant 0 : i32
    return %arg0, %c0_i32 : i32, i32
  }
  func.func @transform_1(%arg0: i32) -> (i32, i32) {
    %c0_i32 = arith.constant 0 : i32
    %c0_i32_0 = arith.constant 0 : i32
    %c0_i32_1 = arith.constant 0 : i32
    return %c0_i32, %c0_i32_0 : i32, i32
  }
  func.func @transform_2(%arg0: i32) -> (i32, i32) {
    %c0_i32 = arith.constant 0 : i32
    %c0_i32_0 = arith.constant 0 : i32
    %c0_i32_1 = arith.constant 0 : i32
    return %c0_i32, %c0_i32_0 : i32, i32
  }
  func.func @transform_3(%arg0: i32) -> (i32, i32) {
    %c0_i32 = arith.constant 0 : i32
    %c0_i32_0 = arith.constant 0 : i32
    return %arg0, %c0_i32 : i32, i32
  }
}

module attributes {stable_mosaic.version = 11 : i64} {
  func.func @_attn_block_kernel(%arg0: i32, %arg1: memref<1x8x32xf32, #tpu.memory_space<vmem>>, %arg2: memref<32x96xbf16, #tpu.memory_space<vmem>>, %arg3: memref<1x96xf32, #tpu.memory_space<vmem>>, %arg4: memref<32x32xbf16, #tpu.memory_space<vmem>>, %arg5: memref<1x32xf32, #tpu.memory_space<vmem>>, %arg6: memref<1x32xf32, #tpu.memory_space<vmem>>, %arg7: memref<1x32xf32, #tpu.memory_space<vmem>>, %arg8: memref<1x1x8xf32, #tpu.memory_space<vmem>>, %arg9: memref<1x8x32xf32, #tpu.memory_space<vmem>>) attributes {dimension_semantics = [#tpu.dimension_semantics<parallel>], iteration_bounds = array<i64: 2>, scalar_prefetch = 0 : i64, scratch_operands = 0 : i64, tpu.core_type = #tpu.core_type<tc>, window_params = [{transform_indices = @transform_0, window_bounds = array<i64: 1, 8, 32>}, {pipeline_mode = #tpu.pipeline_mode<synchronous>, transform_indices = @transform_1, window_bounds = array<i64: 32, 96>}, {pipeline_mode = #tpu.pipeline_mode<synchronous>, transform_indices = @transform_2, window_bounds = array<i64: 1, 96>}, {pipeline_mode = #tpu.pipeline_mode<synchronous>, transform_indices = @transform_3, window_bounds = array<i64: 32, 32>}, {pipeline_mode = #tpu.pipeline_mode<synchronous>, transform_indices = @transform_4, window_bounds = array<i64: 1, 32>}, {pipeline_mode = #tpu.pipeline_mode<synchronous>, transform_indices = @transform_5, window_bounds = array<i64: 1, 32>}, {pipeline_mode = #tpu.pipeline_mode<synchronous>, transform_indices = @transform_6, window_bounds = array<i64: 1, 32>}, {transform_indices = @transform_7, window_bounds = array<i64: 1, 1, 8>}, {transform_indices = @transform_8, window_bounds = array<i64: 1, 8, 32>}]} {
    %c0 = arith.constant 0 : index
    %c0_0 = arith.constant 0 : index
    %c0_1 = arith.constant 0 : index
    %0 = vector.load %arg1[%c0, %c0_0, %c0_1] : memref<1x8x32xf32, #tpu.memory_space<vmem>>, vector<1x8x32xf32>
    %1 = vector.shape_cast %0 : vector<1x8x32xf32> to vector<8x32xf32>
    %2 = arith.truncf %1 : vector<8x32xf32> to vector<8x32xbf16>
    %c0_2 = arith.constant 0 : index
    %c0_3 = arith.constant 0 : index
    %3 = vector.load %arg2[%c0_2, %c0_3] : memref<32x96xbf16, #tpu.memory_space<vmem>>, vector<32x96xbf16>
    %cst = arith.constant dense<0.000000e+00> : vector<8x96xf32>
    %4 = tpu.matmul %2, %3, %cst {dimension_numbers = #tpu.dot_dimension_numbers<[1], [0], [0], [1], [0, 0, 1, 1], [], []>} : vector<8x32xbf16>, vector<32x96xbf16>, vector<8x96xf32> -> vector<8x96xf32>
    %c0_4 = arith.constant 0 : index
    %c0_5 = arith.constant 0 : index
    %5 = vector.load %arg3[%c0_4, %c0_5] : memref<1x96xf32, #tpu.memory_space<vmem>>, vector<1x96xf32>
    %6 = vector.broadcast %5 : vector<1x96xf32> to vector<8x96xf32>
    %7 = arith.addf %4, %6 : vector<8x96xf32>
    %c0_6 = arith.constant 0 : index
    %c0_7 = arith.constant 0 : index
    %c0_8 = arith.constant 0 : index
    %8 = vector.load %arg8[%c0_6, %c0_7, %c0_8] : memref<1x1x8xf32, #tpu.memory_space<vmem>>, vector<1x1x8xf32>
    %9 = vector.shape_cast %8 : vector<1x1x8xf32> to vector<1x8xf32>
    %10 = vector.extract_strided_slice %7 {offsets = [0, 0], sizes = [8, 16], strides = [1, 1]} : vector<8x96xf32> to vector<8x16xf32>
    %11 = arith.truncf %10 : vector<8x16xf32> to vector<8x16xbf16>
    %12 = vector.extract_strided_slice %7 {offsets = [0, 32], sizes = [8, 16], strides = [1, 1]} : vector<8x96xf32> to vector<8x16xf32>
    %13 = arith.truncf %12 : vector<8x16xf32> to vector<8x16xbf16>
    %14 = vector.extract_strided_slice %7 {offsets = [0, 64], sizes = [8, 16], strides = [1, 1]} : vector<8x96xf32> to vector<8x16xf32>
    %15 = arith.truncf %14 : vector<8x16xf32> to vector<8x16xbf16>
    "tpu.trace_start"() <{level = 10 : i32, message = "qd,kd->qk"}> : () -> ()
    %cst_9 = arith.constant dense<0.000000e+00> : vector<8x8xf32>
    %16 = tpu.matmul %11, %13, %cst_9 {dimension_numbers = #tpu.dot_dimension_numbers<[1], [1], [0], [0], [0, 0, 1, 0], [], []>} : vector<8x16xbf16>, vector<8x16xbf16>, vector<8x8xf32> -> vector<8x8xf32>
    "tpu.trace_stop"() : () -> ()
    %cst_10 = arith.constant 2.500000e-01 : f32
    %17 = vector.broadcast %cst_10 : f32 to vector<8x8xf32>
    %18 = arith.mulf %16, %17 : vector<8x8xf32>
    %19 = vector.broadcast %9 : vector<1x8xf32> to vector<8x8xf32>
    %20 = arith.addf %18, %19 : vector<8x8xf32>
    %cst_11 = arith.constant dense<0xFF800000> : vector<8xf32>
    %21 = vector.multi_reduction <maximumf>, %20, %cst_11 [1] : vector<8x8xf32> to vector<8xf32>
    %22 = vector.shape_cast %21 : vector<8xf32> to vector<8x1xf32>
    %23 = vector.broadcast %22 : vector<8x1xf32> to vector<8x8xf32>
    %24 = arith.subf %20, %23 : vector<8x8xf32>
    %25 = math.exp %24 : vector<8x8xf32>
    %cst_12 = arith.constant dense<0.000000e+00> : vector<8xf32>
    %26 = vector.multi_reduction <add>, %25, %cst_12 [1] : vector<8x8xf32> to vector<8xf32>
    %27 = vector.shape_cast %26 : vector<8xf32> to vector<8x1xf32>
    %28 = tpu.reciprocal %27 {approx = true} : vector<8x1xf32> -> vector<8x1xf32>
    %29 = vector.broadcast %28 : vector<8x1xf32> to vector<8x8xf32>
    %30 = arith.mulf %25, %29 : vector<8x8xf32>
    %31 = arith.truncf %30 : vector<8x8xf32> to vector<8x8xbf16>
    %cst_13 = arith.constant dense<0.000000e+00> : vector<8x16xf32>
    %32 = tpu.matmul %31, %15, %cst_13 {dimension_numbers = #tpu.dot_dimension_numbers<[1], [0], [0], [1], [0, 0, 1, 1], [], []>} : vector<8x8xbf16>, vector<8x16xbf16>, vector<8x16xf32> -> vector<8x16xf32>
    %33 = vector.extract_strided_slice %7 {offsets = [0, 16], sizes = [8, 16], strides = [1, 1]} : vector<8x96xf32> to vector<8x16xf32>
    %34 = arith.truncf %33 : vector<8x16xf32> to vector<8x16xbf16>
    %35 = vector.extract_strided_slice %7 {offsets = [0, 48], sizes = [8, 16], strides = [1, 1]} : vector<8x96xf32> to vector<8x16xf32>
    %36 = arith.truncf %35 : vector<8x16xf32> to vector<8x16xbf16>
    %37 = vector.extract_strided_slice %7 {offsets = [0, 80], sizes = [8, 16], strides = [1, 1]} : vector<8x96xf32> to vector<8x16xf32>
    %38 = arith.truncf %37 : vector<8x16xf32> to vector<8x16xbf16>
    "tpu.trace_start"() <{level = 10 : i32, message = "qd,kd->qk"}> : () -> ()
    %cst_14 = arith.constant dense<0.000000e+00> : vector<8x8xf32>
    %39 = tpu.matmul %34, %36, %cst_14 {dimension_numbers = #tpu.dot_dimension_numbers<[1], [1], [0], [0], [0, 0, 1, 0], [], []>} : vector<8x16xbf16>, vector<8x16xbf16>, vector<8x8xf32> -> vector<8x8xf32>
    "tpu.trace_stop"() : () -> ()
    %cst_15 = arith.constant 2.500000e-01 : f32
    %40 = vector.broadcast %cst_15 : f32 to vector<8x8xf32>
    %41 = arith.mulf %39, %40 : vector<8x8xf32>
    %42 = vector.broadcast %9 : vector<1x8xf32> to vector<8x8xf32>
    %43 = arith.addf %41, %42 : vector<8x8xf32>
    %cst_16 = arith.constant dense<0xFF800000> : vector<8xf32>
    %44 = vector.multi_reduction <maximumf>, %43, %cst_16 [1] : vector<8x8xf32> to vector<8xf32>
    %45 = vector.shape_cast %44 : vector<8xf32> to vector<8x1xf32>
    %46 = vector.broadcast %45 : vector<8x1xf32> to vector<8x8xf32>
    %47 = arith.subf %43, %46 : vector<8x8xf32>
    %48 = math.exp %47 : vector<8x8xf32>
    %cst_17 = arith.constant dense<0.000000e+00> : vector<8xf32>
    %49 = vector.multi_reduction <add>, %48, %cst_17 [1] : vector<8x8xf32> to vector<8xf32>
    %50 = vector.shape_cast %49 : vector<8xf32> to vector<8x1xf32>
    %51 = tpu.reciprocal %50 {approx = true} : vector<8x1xf32> -> vector<8x1xf32>
    %52 = vector.broadcast %51 : vector<8x1xf32> to vector<8x8xf32>
    %53 = arith.mulf %48, %52 : vector<8x8xf32>
    %54 = arith.truncf %53 : vector<8x8xf32> to vector<8x8xbf16>
    %cst_18 = arith.constant dense<0.000000e+00> : vector<8x16xf32>
    %55 = tpu.matmul %54, %38, %cst_18 {dimension_numbers = #tpu.dot_dimension_numbers<[1], [0], [0], [1], [0, 0, 1, 1], [], []>} : vector<8x8xbf16>, vector<8x16xbf16>, vector<8x16xf32> -> vector<8x16xf32>
    %56 = tpu.concatenate %32, %55 in 1 : vector<8x16xf32>, vector<8x16xf32> -> vector<8x32xf32>
    %57 = arith.truncf %56 : vector<8x32xf32> to vector<8x32xbf16>
    %c0_19 = arith.constant 0 : index
    %c0_20 = arith.constant 0 : index
    %58 = vector.load %arg4[%c0_19, %c0_20] : memref<32x32xbf16, #tpu.memory_space<vmem>>, vector<32x32xbf16>
    %cst_21 = arith.constant dense<0.000000e+00> : vector<8x32xf32>
    %59 = tpu.matmul %57, %58, %cst_21 {dimension_numbers = #tpu.dot_dimension_numbers<[1], [0], [0], [1], [0, 0, 1, 1], [], []>} : vector<8x32xbf16>, vector<32x32xbf16>, vector<8x32xf32> -> vector<8x32xf32>
    %c0_22 = arith.constant 0 : index
    %c0_23 = arith.constant 0 : index
    %60 = vector.load %arg5[%c0_22, %c0_23] : memref<1x32xf32, #tpu.memory_space<vmem>>, vector<1x32xf32>
    %61 = vector.broadcast %60 : vector<1x32xf32> to vector<8x32xf32>
    %62 = arith.addf %59, %61 : vector<8x32xf32>
    %63 = arith.addf %62, %1 : vector<8x32xf32>
    %cst_24 = arith.constant dense<0.000000e+00> : vector<8xf32>
    %64 = vector.multi_reduction <add>, %63, %cst_24 [1] : vector<8x32xf32> to vector<8xf32>
    %65 = vector.shape_cast %64 : vector<8xf32> to vector<8x1xf32>
    %cst_25 = arith.constant 3.200000e+01 : f32
    %66 = vector.broadcast %cst_25 : f32 to vector<8x1xf32>
    %67 = arith.divf %65, %66 : vector<8x1xf32>
    %68 = vector.broadcast %67 : vector<8x1xf32> to vector<8x32xf32>
    %69 = arith.subf %63, %68 : vector<8x32xf32>
    %70 = arith.mulf %69, %69 : vector<8x32xf32>
    %cst_26 = arith.constant dense<0.000000e+00> : vector<8xf32>
    %71 = vector.multi_reduction <add>, %70, %cst_26 [1] : vector<8x32xf32> to vector<8xf32>
    %72 = vector.shape_cast %71 : vector<8xf32> to vector<8x1xf32>
    %cst_27 = arith.constant 3.200000e+01 : f32
    %73 = vector.broadcast %cst_27 : f32 to vector<8x1xf32>
    %74 = arith.divf %72, %73 : vector<8x1xf32>
    %75 = vector.broadcast %67 : vector<8x1xf32> to vector<8x32xf32>
    %76 = arith.subf %63, %75 : vector<8x32xf32>
    %cst_28 = arith.constant 9.99999996E-13 : f32
    %77 = vector.broadcast %cst_28 : f32 to vector<8x1xf32>
    %78 = arith.addf %74, %77 : vector<8x1xf32>
    %79 = math.rsqrt %78 : vector<8x1xf32>
    %80 = vector.broadcast %79 : vector<8x1xf32> to vector<8x32xf32>
    %81 = arith.mulf %76, %80 : vector<8x32xf32>
    %c0_29 = arith.constant 0 : index
    %c0_30 = arith.constant 0 : index
    %82 = vector.load %arg6[%c0_29, %c0_30] : memref<1x32xf32, #tpu.memory_space<vmem>>, vector<1x32xf32>
    %83 = vector.broadcast %82 : vector<1x32xf32> to vector<8x32xf32>
    %84 = arith.mulf %81, %83 : vector<8x32xf32>
    %c0_31 = arith.constant 0 : index
    %c0_32 = arith.constant 0 : index
    %85 = vector.load %arg7[%c0_31, %c0_32] : memref<1x32xf32, #tpu.memory_space<vmem>>, vector<1x32xf32>
    %86 = vector.broadcast %85 : vector<1x32xf32> to vector<8x32xf32>
    %87 = arith.addf %84, %86 : vector<8x32xf32>
    %c0_33 = arith.constant 0 : index
    %c0_34 = arith.constant 0 : index
    %c0_35 = arith.constant 0 : index
    %88 = vector.load %arg9[%c0_33, %c0_34, %c0_35] : memref<1x8x32xf32, #tpu.memory_space<vmem>>, vector<1x8x32xf32>
    %89 = vector.shape_cast %88 : vector<1x8x32xf32> to vector<8x32xf32>
    %90 = vector.shape_cast %87 : vector<8x32xf32> to vector<1x8x32xf32>
    tpu.vector_store %arg9[%c0_33, %c0_34, %c0_35], %90 {strides = array<i32>} : memref<1x8x32xf32, #tpu.memory_space<vmem>>, vector<1x8x32xf32>,
    return
  }
  func.func @transform_0(%arg0: i32) -> (i32, i32, i32) {
    %c0_i32 = arith.constant 0 : i32
    %c0_i32_0 = arith.constant 0 : i32
    %c0_i32_1 = arith.constant 0 : i32
    return %arg0, %c0_i32, %c0_i32_0 : i32, i32, i32
  }
  func.func @transform_1(%arg0: i32) -> (i32, i32) {
    %c0_i32 = arith.constant 0 : i32
    %c0_i32_0 = arith.constant 0 : i32
    %c0_i32_1 = arith.constant 0 : i32
    return %c0_i32, %c0_i32_0 : i32, i32
  }
  func.func @transform_2(%arg0: i32) -> (i32, i32) {
    %c0_i32 = arith.constant 0 : i32
    %c0_i32_0 = arith.constant 0 : i32
    %c0_i32_1 = arith.constant 0 : i32
    return %c0_i32, %c0_i32_0 : i32, i32
  }
  func.func @transform_3(%arg0: i32) -> (i32, i32) {
    %c0_i32 = arith.constant 0 : i32
    %c0_i32_0 = arith.constant 0 : i32
    %c0_i32_1 = arith.constant 0 : i32
    return %c0_i32, %c0_i32_0 : i32, i32
  }
  func.func @transform_4(%arg0: i32) -> (i32, i32) {
    %c0_i32 = arith.constant 0 : i32
    %c0_i32_0 = arith.constant 0 : i32
    %c0_i32_1 = arith.constant 0 : i32
    return %c0_i32, %c0_i32_0 : i32, i32
  }
  func.func @transform_5(%arg0: i32) -> (i32, i32) {
    %c0_i32 = arith.constant 0 : i32
    %c0_i32_0 = arith.constant 0 : i32
    %c0_i32_1 = arith.constant 0 : i32
    return %c0_i32, %c0_i32_0 : i32, i32
  }
  func.func @transform_6(%arg0: i32) -> (i32, i32) {
    %c0_i32 = arith.constant 0 : i32
    %c0_i32_0 = arith.constant 0 : i32
    %c0_i32_1 = arith.constant 0 : i32
    return %c0_i32, %c0_i32_0 : i32, i32
  }
  func.func @transform_7(%arg0: i32) -> (i32, i32, i32) {
    %c0_i32 = arith.constant 0 : i32
    %c0_i32_0 = arith.constant 0 : i32
    %c0_i32_1 = arith.constant 0 : i32
    return %arg0, %c0_i32, %c0_i32_0 : i32, i32, i32
  }
  func.func @transform_8(%arg0: i32) -> (i32, i32, i32) {
    %c0_i32 = arith.constant 0 : i32
    %c0_i32_0 = arith.constant 0 : i32
    %c0_i32_1 = arith.constant 0 : i32
    return %arg0, %c0_i32, %c0_i32_0 : i32, i32, i32
  }
}

module attributes {stable_mosaic.version = 11 : i64} {
  func.func @_ffn_block_kernel(%arg0: i32, %arg1: memref<16x32xf32, #tpu.memory_space<vmem>>, %arg2: memref<32x64xbf16, #tpu.memory_space<vmem>>, %arg3: memref<1x64xf32, #tpu.memory_space<vmem>>, %arg4: memref<64x32xbf16, #tpu.memory_space<vmem>>, %arg5: memref<1x32xf32, #tpu.memory_space<vmem>>, %arg6: memref<1x32xf32, #tpu.memory_space<vmem>>, %arg7: memref<1x32xf32, #tpu.memory_space<vmem>>, %arg8: memref<16x32xf32, #tpu.memory_space<vmem>>) attributes {dimension_semantics = [#tpu.dimension_semantics<parallel>], iteration_bounds = array<i64: 1>, scalar_prefetch = 0 : i64, scratch_operands = 0 : i64, tpu.core_type = #tpu.core_type<tc>, window_params = [{transform_indices = @transform_0, window_bounds = array<i64: 16, 32>}, {pipeline_mode = #tpu.pipeline_mode<synchronous>, transform_indices = @transform_1, window_bounds = array<i64: 32, 64>}, {pipeline_mode = #tpu.pipeline_mode<synchronous>, transform_indices = @transform_2, window_bounds = array<i64: 1, 64>}, {pipeline_mode = #tpu.pipeline_mode<synchronous>, transform_indices = @transform_3, window_bounds = array<i64: 64, 32>}, {pipeline_mode = #tpu.pipeline_mode<synchronous>, transform_indices = @transform_4, window_bounds = array<i64: 1, 32>}, {pipeline_mode = #tpu.pipeline_mode<synchronous>, transform_indices = @transform_5, window_bounds = array<i64: 1, 32>}, {pipeline_mode = #tpu.pipeline_mode<synchronous>, transform_indices = @transform_6, window_bounds = array<i64: 1, 32>}, {transform_indices = @transform_7, window_bounds = array<i64: 16, 32>}]} {
    %c0 = arith.constant 0 : index
    %c0_0 = arith.constant 0 : index
    %0 = vector.load %arg1[%c0, %c0_0] : memref<16x32xf32, #tpu.memory_space<vmem>>, vector<16x32xf32>
    %1 = arith.truncf %0 : vector<16x32xf32> to vector<16x32xbf16>
    %c0_1 = arith.constant 0 : index
    %c0_2 = arith.constant 0 : index
    %2 = vector.load %arg2[%c0_1, %c0_2] : memref<32x64xbf16, #tpu.memory_space<vmem>>, vector<32x64xbf16>
    %cst = arith.constant dense<0.000000e+00> : vector<16x64xf32>
    %3 = tpu.matmul %1, %2, %cst {dimension_numbers = #tpu.dot_dimension_numbers<[1], [0], [0], [1], [0, 0, 1, 1], [], []>} : vector<16x32xbf16>, vector<32x64xbf16>, vector<16x64xf32> -> vector<16x64xf32>
    %c0_3 = arith.constant 0 : index
    %c0_4 = arith.constant 0 : index
    %4 = vector.load %arg3[%c0_3, %c0_4] : memref<1x64xf32, #tpu.memory_space<vmem>>, vector<1x64xf32>
    %5 = vector.broadcast %4 : vector<1x64xf32> to vector<16x64xf32>
    %6 = arith.addf %3, %5 : vector<16x64xf32>
    %7 = arith.mulf %6, %6 : vector<16x64xf32>
    %8 = arith.mulf %6, %7 : vector<16x64xf32>
    %cst_5 = arith.constant 4.471500e-02 : f32
    %9 = vector.broadcast %cst_5 : f32 to vector<16x64xf32>
    %10 = arith.mulf %9, %8 : vector<16x64xf32>
    %11 = arith.addf %6, %10 : vector<16x64xf32>
    %cst_6 = arith.constant 0.797884583 : f32
    %12 = vector.broadcast %cst_6 : f32 to vector<16x64xf32>
    %13 = arith.mulf %12, %11 : vector<16x64xf32>
    %14 = math.tanh %13 : vector<16x64xf32>
    %cst_7 = arith.constant 1.000000e+00 : f32
    %15 = vector.broadcast %cst_7 : f32 to vector<16x64xf32>
    %16 = arith.addf %15, %14 : vector<16x64xf32>
    %cst_8 = arith.constant 5.000000e-01 : f32
    %17 = vector.broadcast %cst_8 : f32 to vector<16x64xf32>
    %18 = arith.mulf %17, %16 : vector<16x64xf32>
    %19 = arith.mulf %6, %18 : vector<16x64xf32>
    %20 = arith.truncf %19 : vector<16x64xf32> to vector<16x64xbf16>
    %c0_9 = arith.constant 0 : index
    %c0_10 = arith.constant 0 : index
    %21 = vector.load %arg4[%c0_9, %c0_10] : memref<64x32xbf16, #tpu.memory_space<vmem>>, vector<64x32xbf16>
    %cst_11 = arith.constant dense<0.000000e+00> : vector<16x32xf32>
    %22 = tpu.matmul %20, %21, %cst_11 {dimension_numbers = #tpu.dot_dimension_numbers<[1], [0], [0], [1], [0, 0, 1, 1], [], []>} : vector<16x64xbf16>, vector<64x32xbf16>, vector<16x32xf32> -> vector<16x32xf32>
    %c0_12 = arith.constant 0 : index
    %c0_13 = arith.constant 0 : index
    %23 = vector.load %arg5[%c0_12, %c0_13] : memref<1x32xf32, #tpu.memory_space<vmem>>, vector<1x32xf32>
    %24 = vector.broadcast %23 : vector<1x32xf32> to vector<16x32xf32>
    %25 = arith.addf %22, %24 : vector<16x32xf32>
    %26 = arith.addf %25, %0 : vector<16x32xf32>
    %cst_14 = arith.constant dense<0.000000e+00> : vector<16xf32>
    %27 = vector.multi_reduction <add>, %26, %cst_14 [1] : vector<16x32xf32> to vector<16xf32>
    %28 = vector.shape_cast %27 : vector<16xf32> to vector<16x1xf32>
    %cst_15 = arith.constant 3.200000e+01 : f32
    %29 = vector.broadcast %cst_15 : f32 to vector<16x1xf32>
    %30 = arith.divf %28, %29 : vector<16x1xf32>
    %31 = vector.broadcast %30 : vector<16x1xf32> to vector<16x32xf32>
    %32 = arith.subf %26, %31 : vector<16x32xf32>
    %33 = arith.mulf %32, %32 : vector<16x32xf32>
    %cst_16 = arith.constant dense<0.000000e+00> : vector<16xf32>
    %34 = vector.multi_reduction <add>, %33, %cst_16 [1] : vector<16x32xf32> to vector<16xf32>
    %35 = vector.shape_cast %34 : vector<16xf32> to vector<16x1xf32>
    %cst_17 = arith.constant 3.200000e+01 : f32
    %36 = vector.broadcast %cst_17 : f32 to vector<16x1xf32>
    %37 = arith.divf %35, %36 : vector<16x1xf32>
    %38 = vector.broadcast %30 : vector<16x1xf32> to vector<16x32xf32>
    %39 = arith.subf %26, %38 : vector<16x32xf32>
    %cst_18 = arith.constant 9.99999996E-13 : f32
    %40 = vector.broadcast %cst_18 : f32 to vector<16x1xf32>
    %41 = arith.addf %37, %40 : vector<16x1xf32>
    %42 = math.rsqrt %41 : vector<16x1xf32>
    %43 = vector.broadcast %42 : vector<16x1xf32> to vector<16x32xf32>
    %44 = arith.mulf %39, %43 : vector<16x32xf32>
    %c0_19 = arith.constant 0 : index
    %c0_20 = arith.constant 0 : index
    %45 = vector.load %arg6[%c0_19, %c0_20] : memref<1x32xf32, #tpu.memory_space<vmem>>, vector<1x32xf32>
    %46 = vector.broadcast %45 : vector<1x32xf32> to vector<16x32xf32>
    %47 = arith.mulf %44, %46 : vector<16x32xf32>
    %c0_21 = arith.constant 0 : index
    %c0_22 = arith.constant 0 : index
    %48 = vector.load %arg7[%c0_21, %c0_22] : memref<1x32xf32, #tpu.memory_space<vmem>>, vector<1x32xf32>
    %49 = vector.broadcast %48 : vector<1x32xf32> to vector<16x32xf32>
    %50 = arith.addf %47, %49 : vector<16x32xf32>
    %c0_23 = arith.constant 0 : index
    %c0_24 = arith.constant 0 : index
    %51 = vector.load %arg8[%c0_23, %c0_24] : memref<16x32xf32, #tpu.memory_space<vmem>>, vector<16x32xf32>
    tpu.vector_store %arg8[%c0_23, %c0_24], %50 {strides = array<i32>} : memref<16x32xf32, #tpu.memory_space<vmem>>, vector<16x32xf32>,
    return
  }
  func.func @transform_0(%arg0: i32) -> (i32, i32) {
    %c0_i32 = arith.constant 0 : i32
    %c0_i32_0 = arith.constant 0 : i32
    return %arg0, %c0_i32 : i32, i32
  }
  func.func @transform_1(%arg0: i32) -> (i32, i32) {
    %c0_i32 = arith.constant 0 : i32
    %c0_i32_0 = arith.constant 0 : i32
    %c0_i32_1 = arith.constant 0 : i32
    return %c0_i32, %c0_i32_0 : i32, i32
  }
  func.func @transform_2(%arg0: i32) -> (i32, i32) {
    %c0_i32 = arith.constant 0 : i32
    %c0_i32_0 = arith.constant 0 : i32
    %c0_i32_1 = arith.constant 0 : i32
    return %c0_i32, %c0_i32_0 : i32, i32
  }
  func.func @transform_3(%arg0: i32) -> (i32, i32) {
    %c0_i32 = arith.constant 0 : i32
    %c0_i32_0 = arith.constant 0 : i32
    %c0_i32_1 = arith.constant 0 : i32
    return %c0_i32, %c0_i32_0 : i32, i32
  }
  func.func @transform_4(%arg0: i32) -> (i32, i32) {
    %c0_i32 = arith.constant 0 : i32
    %c0_i32_0 = arith.constant 0 : i32
    %c0_i32_1 = arith.constant 0 : i32
    return %c0_i32, %c0_i32_0 : i32, i32
  }
  func.func @transform_5(%arg0: i32) -> (i32, i32) {
    %c0_i32 = arith.constant 0 : i32
    %c0_i32_0 = arith.constant 0 : i32
    %c0_i32_1 = arith.constant 0 : i32
    return %c0_i32, %c0_i32_0 : i32, i32
  }
  func.func @transform_6(%arg0: i32) -> (i32, i32) {
    %c0_i32 = arith.constant 0 : i32
    %c0_i32_0 = arith.constant 0 : i32
    %c0_i32_1 = arith.constant 0 : i32
    return %c0_i32, %c0_i32_0 : i32, i32
  }
  func.func @transform_7(%arg0: i32) -> (i32, i32) {
    %c0_i32 = arith.constant 0 : i32
    %c0_i32_0 = arith.constant 0 : i32
    return %arg0, %c0_i32 : i32, i32
  }
}

module attributes {stable_mosaic.version = 11 : i64} {
  func.func @_detector_loss_kernel(%arg0: memref<16x32xf32, #tpu.memory_space<vmem>>, %arg1: memref<1x32xf32, #tpu.memory_space<vmem>>, %arg2: memref<1x1xf32, #tpu.memory_space<vmem>>, %arg3: memref<16x1xf32, #tpu.memory_space<vmem>>, %arg4: memref<16x1xf32, #tpu.memory_space<vmem>>, %arg5: memref<16x1xf32, #tpu.memory_space<vmem>>, %arg6: memref<1x1xf32, #tpu.memory_space<vmem>>) attributes {dimension_semantics = [], scalar_prefetch = 0 : i64, scratch_operands = 0 : i64, tpu.core_type = #tpu.core_type<tc>} {
    %c0 = arith.constant 0 : index
    %c0_0 = arith.constant 0 : index
    %0 = vector.load %arg0[%c0, %c0_0] : memref<16x32xf32, #tpu.memory_space<vmem>>, vector<16x32xf32>
    %c0_1 = arith.constant 0 : index
    %c0_2 = arith.constant 0 : index
    %1 = vector.load %arg1[%c0_1, %c0_2] : memref<1x32xf32, #tpu.memory_space<vmem>>, vector<1x32xf32>
    %2 = vector.broadcast %1 : vector<1x32xf32> to vector<16x32xf32>
    %3 = arith.mulf %0, %2 : vector<16x32xf32>
    %cst = arith.constant dense<0.000000e+00> : vector<16xf32>
    %4 = vector.multi_reduction <add>, %3, %cst [1] : vector<16x32xf32> to vector<16xf32>
    %5 = vector.shape_cast %4 : vector<16xf32> to vector<16x1xf32>
    %c0_3 = arith.constant 0 : index
    %c0_4 = arith.constant 0 : index
    %6 = vector.load %arg2[%c0_3, %c0_4] : memref<1x1xf32, #tpu.memory_space<vmem>>, vector<1x1xf32>
    %7 = vector.broadcast %6 : vector<1x1xf32> to vector<16x1xf32>
    %8 = arith.addf %5, %7 : vector<16x1xf32>
    %c0_5 = arith.constant 0 : index
    %c0_6 = arith.constant 0 : index
    %9 = vector.load %arg5[%c0_5, %c0_6] : memref<16x1xf32, #tpu.memory_space<vmem>>, vector<16x1xf32>
    tpu.vector_store %arg5[%c0_5, %c0_6], %8 {strides = array<i32>} : memref<16x1xf32, #tpu.memory_space<vmem>>, vector<16x1xf32>,
    %c0_7 = arith.constant 0 : index
    %c0_8 = arith.constant 0 : index
    %10 = vector.load %arg4[%c0_7, %c0_8] : memref<16x1xf32, #tpu.memory_space<vmem>>, vector<16x1xf32>
    %c0_9 = arith.constant 0 : index
    %c0_10 = arith.constant 0 : index
    %11 = vector.load %arg3[%c0_9, %c0_10] : memref<16x1xf32, #tpu.memory_space<vmem>>, vector<16x1xf32>
    %cst_11 = arith.constant 0.000000e+00 : f32
    %12 = vector.broadcast %cst_11 : f32 to vector<16x1xf32>
    %13 = arith.maximumf %8, %12 : vector<16x1xf32>
    %14 = arith.mulf %8, %10 : vector<16x1xf32>
    %15 = arith.subf %13, %14 : vector<16x1xf32>
    %16 = math.absf %8 : vector<16x1xf32>
    %cst_12 = arith.constant 0.000000e+00 : f32
    %17 = vector.broadcast %cst_12 : f32 to vector<16x1xf32>
    %18 = arith.subf %17, %16 : vector<16x1xf32>
    %19 = math.exp %18 : vector<16x1xf32>
    %20 = math.log1p %19 : vector<16x1xf32>
    %21 = arith.addf %15, %20 : vector<16x1xf32>
    %22 = arith.mulf %21, %11 : vector<16x1xf32>
    %23 = vector.shape_cast %22 : vector<16x1xf32> to vector<1x16x1xf32>
    %cst_13 = arith.constant dense<0.000000e+00> : vector<1xf32>
    %24 = vector.multi_reduction <add>, %23, %cst_13 [1, 2] : vector<1x16x1xf32> to vector<1xf32>
    %25 = vector.shape_cast %24 : vector<1xf32> to vector<1x1x1xf32>
    %26 = vector.extract %25[0, 0, 0] : f32 from vector<1x1x1xf32>
    %27 = vector.broadcast %26 : f32 to vector<1x1xf32>
    %28 = vector.shape_cast %11 : vector<16x1xf32> to vector<1x16x1xf32>
    %cst_14 = arith.constant dense<0.000000e+00> : vector<1xf32>
    %29 = vector.multi_reduction <add>, %28, %cst_14 [1, 2] : vector<1x16x1xf32> to vector<1xf32>
    %30 = vector.shape_cast %29 : vector<1xf32> to vector<1x1x1xf32>
    %31 = vector.extract %30[0, 0, 0] : f32 from vector<1x1x1xf32>
    %32 = vector.broadcast %31 : f32 to vector<1x1xf32>
    %33 = arith.divf %27, %32 : vector<1x1xf32>
    %c0_15 = arith.constant 0 : index
    %c0_16 = arith.constant 0 : index
    %34 = vector.load %arg6[%c0_15, %c0_16] : memref<1x1xf32, #tpu.memory_space<vmem>>, vector<1x1xf32>
    tpu.vector_store %arg6[%c0_15, %c0_16], %33 {strides = array<i32>} : memref<1x1xf32, #tpu.memory_space<vmem>>, vector<1x1xf32>,
    return
  }
}

</mosaic_0001>

<llo_original>
// kernel: electra_for_spelling_check.6
$region0: #{electra_for_spelling_check.6}
  #allocation0 [shape = 'u32[]', space=smem, size = 0x4, offset = 0x4, fixed_abs, tag = 'smem constant byte address 0x4 - core index']
  #allocation1 [shape = 'u32[144,128]{1,0:T(1,128)}', space=vmem, size = 0x12000, scoped, tag = 'internal scratch']
  %s0 = inlined_call_operand.vmem [shape: f32[16,32], index: 0, kind: input, shape index: {}]
  %s1 = inlined_call_operand.vmem [shape: f32[1,32], index: 1, kind: input, shape index: {}]
  %s2 = inlined_call_operand.vmem [shape: f32[1,32], index: 2, kind: input, shape index: {}]
  %s3 = inlined_call_operand.vmem [shape: f32[16,32], index: 3, kind: output, shape index: {}]
  %s4 = sld [smem:[#allocation0]]
  $region22: #{electra_for_spelling_check.6} parent=0
    _
  %s6 = ssub.s32 1, %s4
  %s7 = scalar_select 0, %s6, %s4
  // Predicated region
  $region2: #{electra_for_spelling_check.6} parent=0 // pred_check
    _
  $region3: #{electra_for_spelling_check.6} parent=0 // pred_check_branch
    %9 = sbr.rel (0) target = $region5
  $region4: #{electra_for_spelling_check.6} parent=0 // pred_region
    _
  $region5: #{electra_for_spelling_check.6} parent=0 // pred_fallthru
    _
  // Predicated region
  $region6: #{electra_for_spelling_check.6} parent=0 // pred_check
    _
  $region7: #{electra_for_spelling_check.6} parent=0 // pred_check_branch
    %11 = sbr.rel (0) target = $region9
  $region8: #{electra_for_spelling_check.6} parent=0 // pred_region
    _
  $region9: #{electra_for_spelling_check.6} parent=0 // pred_fallthru
    _
  // Predicated region
  $region10: #{electra_for_spelling_check.6} parent=0 // pred_check
    _
  $region11: #{electra_for_spelling_check.6} parent=0 // pred_check_branch
    %13 = sbr.rel (0) target = $region13
  $region12: #{electra_for_spelling_check.6} parent=0 // pred_region
    _
  $region13: #{electra_for_spelling_check.6} parent=0 // pred_fallthru
    _
  %v14 = vld [vmem:[%s0] sm:$0xff]
  %v15 = vld [vmem:[%s0 + $0x8] sm:$0xff]
  %vm16 = vcmask 261120
  %v17 = vsel %vm16, %v14, 0.0
  %18 = vadd.xlane.f32.xlu0 %v17
  %v19 = vpop.xlane.xlu0 %18
  %v20 = vsel %vm16, %v15, 0.0
  %21 = vadd.xlane.f32.xlu0 %v20
  %v22 = vpop.xlane.xlu0 %21
  %v23 = vrcp.pop 32.0
  %v24 = vmul.f32 %v19, %v23
  %v25 = vmul.f32 %v22, %v23
  %v26 = vsub.f32 %v14, %v24
  %v27 = vsub.f32 %v15, %v25
  %v28 = vmul.f32 %v26, %v26
  %v29 = vmul.f32 %v27, %v27
  %v30 = vsel %vm16, %v28, 0.0
  %31 = vadd.xlane.f32.xlu0 %v30
  %v32 = vpop.xlane.xlu0 %31
  %v33 = vsel %vm16, %v29, 0.0
  %34 = vadd.xlane.f32.xlu0 %v33
  %v35 = vpop.xlane.xlu0 %34
  %v36 = vmul.f32 %v32, %v23
  %v37 = vmul.f32 %v35, %v23
  %v38 = vadd.f32 %v36, 1e-12
  %v39 = vadd.f32 %v37, 1e-12
  %v40 = vrsqrt.pop %v38
  %v41 = vrsqrt.pop %v39
  %v42 = vmul.f32 %v26, %v40
  %v43 = vmul.f32 %v27, %v41
  %v44 = vld [vmem:[%s1] sm:$0x1]
  %v46 = vlaneseq
  %v47 = vshrl.u32 %v46, 7
  %v48 = vsub.s32 0, %v47
  %v49 = vrot.slane %v44, %v48
  %v51 = vmul.f32 %v42, %v49
  %v52 = vmul.f32 %v43, %v49
  %v53 = vld [vmem:[%s2] sm:$0x1]
  %v55 = vlaneseq
  %v56 = vshrl.u32 %v55, 7
  %v57 = vsub.s32 0, %v56
  %v58 = vrot.slane %v53, %v57
  %v60 = vadd.f32 %v51, %v58
  %v61 = vadd.f32 %v52, %v58
  %62 = vst.msk [vmem:[%s3] sm:$0xff] %vm16, %v60
  %63 = vst.msk [vmem:[%s3 + $0x8] sm:$0xff] %vm16, %v61
  // Predicated region
  $region14: #{electra_for_spelling_check.6} parent=0 // pred_check
    _
  $region15: #{electra_for_spelling_check.6} parent=0 // pred_check_branch
    %65 = sbr.rel (0) target = $region17
  $region16: #{electra_for_spelling_check.6} parent=0 // pred_region
    _
  $region17: #{electra_for_spelling_check.6} parent=0 // pred_fallthru
    _
  // Predicated region
  $region18: #{electra_for_spelling_check.6} parent=0 // pred_check
    _
  $region19: #{electra_for_spelling_check.6} parent=0 // pred_check_branch
    %67 = sbr.rel (0) target = $region21
  $region20: #{electra_for_spelling_check.6} parent=0 // pred_region
    _
  $region21: #{electra_for_spelling_check.6} parent=0 // pred_fallthru
    _

// kernel: electra_for_spelling_check.11
$region0: #{electra_for_spelling_check.11}
  #allocation0 [shape = 'u32[]', space=smem, size = 0x4, offset = 0x4, fixed_abs, tag = 'smem constant byte address 0x4 - core index']
  #allocation1 [shape = 'u32[144,128]{1,0:T(1,128)}', space=vmem, size = 0x12000, scoped, tag = 'internal scratch']
  #allocation2 [shape = 'f32[1,1]{1,0:T(1,128)S(1)}', space=vmem, size = 0x200, scoped, tag = 'scoped memory for electra_for_spelling_check.11']
  %s0 = inlined_call_operand.vmem [shape: f32[16,32], index: 0, kind: input, shape index: {}]
  %s1 = inlined_call_operand.vmem [shape: f32[1,32], index: 1, kind: input, shape index: {}]
  %s2 = inlined_call_operand.<no memory space> [shape: f32[1,1], index: 2, kind: input, shape index: {}]
  %s3 = inlined_call_operand.vmem [shape: f32[16,1], index: 3, kind: input, shape index: {}]
  %s4 = inlined_call_operand.vmem [shape: f32[16,1], index: 4, kind: input, shape index: {}]
  %s5 = inlined_call_operand.vmem [shape: f32[16,1], index: 5, kind: output, shape index: {0}]
  %s6 = inlined_call_operand.hbm [shape: f32[1,1], index: 6, kind: output, shape index: {1}]
  %7 = xla_tuple %s5, %s6
  %s8 = sld [smem:[#allocation0]]
  $region38: #{electra_for_spelling_check.11} parent=0
    _
  %s10 = ssub.s32 1, %s8
  %s11 = scalar_select 0, %s10, %s8
  %v12 = vstv %s2
  %13 = vst [vmem:[#allocation2] sm:$0x1] %v12
  $region1: #{electra_for_spelling_check.11} parent=0
    #allocation3 [shape = 'u8[512]{0}', space=vmem, size = 0x400, scoped, tag = 'output window, operand 1, single buffered']
    #allocation4 [shape = 's32[1]{0}', space=sflag, size = 0x4, scoped, tag = 'scoped memory for electra_for_spelling_check.11']
    %14 = vsyncpa [#allocation4], 0
    // Predicated region
    $region2: #{electra_for_spelling_check.11} parent=1 // pred_check
      _
    $region3: #{electra_for_spelling_check.11} parent=1 // pred_check_branch
      %16 = sbr.rel (0) target = $region5
    $region4: #{electra_for_spelling_check.11} parent=1 // pred_region
      _
    $region5: #{electra_for_spelling_check.11} parent=1 // pred_fallthru
      _
    // Predicated region
    $region6: #{electra_for_spelling_check.11} parent=1 // pred_check
      _
    $region7: #{electra_for_spelling_check.11} parent=1 // pred_check_branch
      %18 = sbr.rel (0) target = $region9
    $region8: #{electra_for_spelling_check.11} parent=1 // pred_region
      _
    $region9: #{electra_for_spelling_check.11} parent=1 // pred_fallthru
      _
    // Predicated region
    $region10: #{electra_for_spelling_check.11} parent=1 // pred_check
      _
    $region11: #{electra_for_spelling_check.11} parent=1 // pred_check_branch
      %20 = sbr.rel (0) target = $region13
    $region12: #{electra_for_spelling_check.11} parent=1 // pred_region
      _
    $region13: #{electra_for_spelling_check.11} parent=1 // pred_fallthru
      _
    // Predicated region
    $region14: #{electra_for_spelling_check.11} parent=1 // pred_check
      _
    $region15: #{electra_for_spelling_check.11} parent=1 // pred_check_branch
      %22 = sbr.rel (0) target = $region17
    $region16: #{electra_for_spelling_check.11} parent=1 // pred_region
      _
    $region17: #{electra_for_spelling_check.11} parent=1 // pred_fallthru
      _
    // Predicated region
    $region18: #{electra_for_spelling_check.11} parent=1 // pred_check
      _
    $region19: #{electra_for_spelling_check.11} parent=1 // pred_check_branch
      %24 = sbr.rel (0) target = $region21
    $region20: #{electra_for_spelling_check.11} parent=1 // pred_region
      _
    $region21: #{electra_for_spelling_check.11} parent=1 // pred_fallthru
      _
    %v25 = vld [vmem:[%s0] sm:$0xff]
    %v26 = vld [vmem:[%s0 + $0x8] sm:$0xff]
    %v27 = vld [vmem:[%s1] sm:$0x1]
    %v29 = vlaneseq
    %v30 = vshrl.u32 %v29, 7
    %v31 = vsub.s32 0, %v30
    %v32 = vrot.slane %v27, %v31
    %v34 = vmul.f32 %v25, %v32
    %v35 = vmul.f32 %v26, %v32
    %vm36 = vcmask 261120
    %v37 = vsel %vm36, %v34, 0.0
    %38 = vadd.xlane.f32.xlu0 %v37
    %v39 = vpop.xlane.xlu0 %38
    %v40 = vsel %vm36, %v35, 0.0
    %41 = vadd.xlane.f32.xlu0 %v40
    %v42 = vpop.xlane.xlu0 %41
    %v43 = vld [vmem:[#allocation2] sm:$0x1]
    %v45 = vlaneseq
    %v46 = vshrl.u32 %v45, 7
    %v47 = vsub.s32 0, %v46
    %v48 = vrot.slane %v43, %v47
    %v50 = vadd.f32 %v39, %v48
    %v51 = vadd.f32 %v42, %v48
    %vm52 = vcmask 7168
    %53 = vst.msk [vmem:[%s5] sm:$0xff] %vm52, %v50
    %54 = vst.msk [vmem:[%s5 + $0x8] sm:$0xff] %vm52, %v51
    %v55 = vld [vmem:[%s4] sm:$0xff]
    %v56 = vld [vmem:[%s4 + $0x8] sm:$0xff]
    %v57 = vld [vmem:[%s3] sm:$0xff]
    %v58 = vld [vmem:[%s3 + $0x8] sm:$0xff]
    %v59 = vmax.f32 %v50, 0.0
    %v60 = vmax.f32 %v51, 0.0
    %v61 = vmul.f32 %v50, %v55
    %v62 = vmul.f32 %v51, %v56
    %v63 = vsub.f32 %v59, %v61
    %v64 = vsub.f32 %v60, %v62
    %v65 = vand.u32 2147483647, %v50
    %v66 = vand.u32 2147483647, %v51
    %v67 = vsub.f32 0.0, %v65
    %v68 = vsub.f32 0.0, %v66
    %v69 = vmul.f32 %v67, 1.442695
    %v70 = vpow.pop %v69
    %v71 = vmul.f32 %v68, 1.442695
    %v72 = vpow.pop %v71
    %v73 = vadd.f32 %v70, 1.0
    %v74 = vlog2.pop %v73
    %v75 = vmul.f32 %v74, 0.6931472
    %v76 = vmul.f32 -0.5, %v70
    %v77 = vadd.f32 %v76, 1.0
    %v78 = vmul.f32 %v77, %v70
    %v79 = vand.u32 2147483647, %v70
    %vm80 = vcmp.lt.f32.partialorder %v79, 0.0004427343
    %v81 = vsel %vm80, %v78, %v75
    %v82 = vadd.f32 %v72, 1.0
    %v83 = vlog2.pop %v82
    %v84 = vmul.f32 %v83, 0.6931472
    %v85 = vmul.f32 -0.5, %v72
    %v86 = vadd.f32 %v85, 1.0
    %v87 = vmul.f32 %v86, %v72
    %v88 = vand.u32 2147483647, %v72
    %vm89 = vcmp.lt.f32.partialorder %v88, 0.0004427343
    %v90 = vsel %vm89, %v87, %v84
    %v91 = vadd.f32 %v63, %v81
    %v92 = vadd.f32 %v64, %v90
    %v93 = vmul.f32 %v91, %v57
    %v94 = vmul.f32 %v92, %v58
    %v95 = vsel %vm52, %v93, 0.0
    %v96 = vsel %vm52, %v94, 0.0
    %v97 = vadd.f32 %v95, %v96
    %98 = vadd.xlane.f32.xlu0 %v97
    %v99 = vpop.xlane.xlu0 %98
    %v100 = vrot.slane %v99, 4
    %v101 = vadd.f32 %v99, %v100
    %v102 = vrot.slane %v101, 2
    %v103 = vadd.f32 %v101, %v102
    %v104 = vrot.slane %v103, 1
    %v105 = vadd.f32 %v103, %v104
    %s106 = vtos %v105
    %v107 = vstv %s106
    %v108 = vsel %vm52, %v57, 0.0
    %v109 = vsel %vm52, %v58, 0.0
    %v110 = vadd.f32 %v108, %v109
    %111 = vadd.xlane.f32.xlu0 %v110
    %v112 = vpop.xlane.xlu0 %111
    %v113 = vrot.slane %v112, 4
    %v114 = vadd.f32 %v112, %v113
    %v115 = vrot.slane %v114, 2
    %v116 = vadd.f32 %v114, %v115
    %v117 = vrot.slane %v116, 1
    %v118 = vadd.f32 %v116, %v117
    %s119 = vtos %v118
    %v120 = vstv %s119
    %v121 = vrcp.pop %v120
    %v122 = vmul.f32 %v107, %v121
    %vm123 = vcmask 0
    %124 = vst.msk [vmem:[#allocation3] sm:$0x1] %vm123, %v122
    // Predicated region
    $region22: #{electra_for_spelling_check.11} parent=1 // pred_check
      _
    $region23: #{electra_for_spelling_check.11} parent=1 // pred_check_branch
      %126 = sbr.rel (0) target = $region25
    $region24: #{electra_for_spelling_check.11} parent=1 // pred_region
      _
    $region25: #{electra_for_spelling_check.11} parent=1 // pred_fallthru
      _
    // Predicated region
    $region26: #{electra_for_spelling_check.11} parent=1 // pred_check
      _
    $region27: #{electra_for_spelling_check.11} parent=1 // pred_check_branch
      %128 = sbr.rel (0) target = $region29
    $region28: #{electra_for_spelling_check.11} parent=1 // pred_region
      %s130 = ssub.s32 16, 16
      %131 = vsyncadd [#allocation4], %s130
      %s133 = sshll.u32 [#allocation3], 4
      %s134 = int_to_ptr.vmem [resolvable:$true] %s133
      %136 = dma.vmem_to_hbm [thread:$0]  %s134, 16, %s6, [#allocation4]
    $region29: #{electra_for_spelling_check.11} parent=1 // pred_fallthru
      _
    // Predicated region
    $region30: #{electra_for_spelling_check.11} parent=1 // pred_check
      _
    $region31: #{electra_for_spelling_check.11} parent=1 // pred_check_branch
      %138 = sbr.rel (0) target = $region33
    $region32: #{electra_for_spelling_check.11} parent=1 // pred_region
      _
    $region33: #{electra_for_spelling_check.11} parent=1 // pred_fallthru
      _
    // Predicated region
    $region34: #{electra_for_spelling_check.11} parent=1 // pred_check
      _
    $region35: #{electra_for_spelling_check.11} parent=1 // pred_check_branch
      %140 = sbr.rel (0) target = $region37
    $region36: #{electra_for_spelling_check.11} parent=1 // pred_region
      %141 = dma.done [#allocation4], 16
    $region37: #{electra_for_spelling_check.11} parent=1 // pred_fallthru
      _
    %142 = vsyncpa [#allocation4], 1

// kernel: electra_for_spelling_check.8
$region0: #{electra_for_spelling_check.8}
  #allocation0 [shape = 'u32[]', space=smem, size = 0x4, offset = 0x4, fixed_abs, tag = 'smem constant byte address 0x4 - core index']
  #allocation1 [shape = 'u32[144,128]{1,0:T(1,128)}', space=vmem, size = 0x12000, scoped, tag = 'internal scratch']
  %s0 = inlined_call_operand.vmem [shape: f32[16,32], index: 0, kind: input, shape index: {}]
  %s1 = inlined_call_operand.vmem [shape: bf16[32,64], index: 1, kind: input, shape index: {}]
  %s2 = inlined_call_operand.vmem [shape: f32[1,64], index: 2, kind: input, shape index: {}]
  %s3 = inlined_call_operand.vmem [shape: bf16[64,32], index: 3, kind: input, shape index: {}]
  %s4 = inlined_call_operand.vmem [shape: f32[1,32], index: 4, kind: input, shape index: {}]
  %s5 = inlined_call_operand.vmem [shape: f32[1,32], index: 5, kind: input, shape index: {}]
  %s6 = inlined_call_operand.vmem [shape: f32[1,32], index: 6, kind: input, shape index: {}]
  %s7 = inlined_call_operand.vmem [shape: f32[16,32], index: 7, kind: output, shape index: {}]
  %s8 = sld [smem:[#allocation0]]
  $region38: #{electra_for_spelling_check.8} parent=0
    _
  %s10 = ssub.s32 1, %s8
  %s11 = scalar_select 0, %s10, %s8
  // Predicated region
  $region2: #{electra_for_spelling_check.8} parent=0 // pred_check
    _
  $region3: #{electra_for_spelling_check.8} parent=0 // pred_check_branch
    %13 = sbr.rel (0) target = $region5
  $region4: #{electra_for_spelling_check.8} parent=0 // pred_region
    _
  $region5: #{electra_for_spelling_check.8} parent=0 // pred_fallthru
    _
  // Predicated region
  $region6: #{electra_for_spelling_check.8} parent=0 // pred_check
    _
  $region7: #{electra_for_spelling_check.8} parent=0 // pred_check_branch
    %15 = sbr.rel (0) target = $region9
  $region8: #{electra_for_spelling_check.8} parent=0 // pred_region
    _
  $region9: #{electra_for_spelling_check.8} parent=0 // pred_fallthru
    _
  // Predicated region
  $region10: #{electra_for_spelling_check.8} parent=0 // pred_check
    _
  $region11: #{electra_for_spelling_check.8} parent=0 // pred_check_branch
    %17 = sbr.rel (0) target = $region13
  $region12: #{electra_for_spelling_check.8} parent=0 // pred_region
    _
  $region13: #{electra_for_spelling_check.8} parent=0 // pred_fallthru
    _
  // Predicated region
  $region14: #{electra_for_spelling_check.8} parent=0 // pred_check
    _
  $region15: #{electra_for_spelling_check.8} parent=0 // pred_check_branch
    %19 = sbr.rel (0) target = $region17
  $region16: #{electra_for_spelling_check.8} parent=0 // pred_region
    _
  $region17: #{electra_for_spelling_check.8} parent=0 // pred_fallthru
    _
  // Predicated region
  $region18: #{electra_for_spelling_check.8} parent=0 // pred_check
    _
  $region19: #{electra_for_spelling_check.8} parent=0 // pred_check_branch
    %21 = sbr.rel (0) target = $region21
  $region20: #{electra_for_spelling_check.8} parent=0 // pred_region
    _
  $region21: #{electra_for_spelling_check.8} parent=0 // pred_fallthru
    _
  // Predicated region
  $region22: #{electra_for_spelling_check.8} parent=0 // pred_check
    _
  $region23: #{electra_for_spelling_check.8} parent=0 // pred_check_branch
    %23 = sbr.rel (0) target = $region25
  $region24: #{electra_for_spelling_check.8} parent=0 // pred_region
    _
  $region25: #{electra_for_spelling_check.8} parent=0 // pred_fallthru
    _
  // Predicated region
  $region26: #{electra_for_spelling_check.8} parent=0 // pred_check
    _
  $region27: #{electra_for_spelling_check.8} parent=0 // pred_check_branch
    %25 = sbr.rel (0) target = $region29
  $region28: #{electra_for_spelling_check.8} parent=0 // pred_region
    _
  $region29: #{electra_for_spelling_check.8} parent=0 // pred_fallthru
    _
  %v27 = vld [vmem:[%s0] sm:$0xff]
  %v28 = vld [vmem:[%s0 + $0x8] sm:$0xff]
  %v29 = vpack.c.bf16 %v28, %v27
  %v30 = vld [vmem:[%s1] sm:$0xf]
  %v31 = vld [vmem:[%s1 + $0x4] sm:$0xf]
  %v32 = vld [vmem:[%s1 + $0x8] sm:$0xf]
  %v33 = vld [vmem:[%s1 + $0xc] sm:$0xf]
  %v34 = vld [vmem:[%s2] sm:$0x1]
  %v36 = vlaneseq
  %v37 = vshrl.u32 %v36, 7
  %v38 = vsub.s32 0, %v37
  %v39 = vrot.slane %v34, %v38
  %v45 = vunpack.c.l.b16 %v30
  %v46 = vunpack.c.l.b16 %v31
  %v47 = vunpack.c.l.b16 %v32
  %v48 = vunpack.c.l.b16 %v33
  %v49 = vpack.c.b16 %v46, %v45
  %v50 = vpack.c.b16 %v48, %v47
  %vm53 = vcmask 261120
  %v55 = vsel %vm53, %v29, 0
  %57 = vmatprep.subr.bf16.mxu0 0
  %58 = vmatpush1.bf16.msra.mxu0 %v49
  %59 = vmatprep.subr.bf16.mxu0 0
  %60 = vmatpush1.bf16.msra.mxu0 %v50
  %61 = vmatprep.subr.bf16.mxu0 0
  %62 = vmatpush1.bf16.msra.mxu0 0
  %63 = vmatprep.subr.bf16.mxu0 0
  %64 = vmatpush1.bf16.msra.mxu0 0
  %65 = vmatprep.subr.bf16.mxu0 0
  %66 = vmatpush1.bf16.msra.mxu0 0
  %67 = vmatprep.subr.bf16.mxu0 0
  %68 = vmatpush1.bf16.msra.mxu0 0
  %69 = vmatprep.subr.bf16.mxu0 0
  %70 = vmatpush1.bf16.msra.mxu0 0
  %71 = vmatprep.subr.bf16.mxu0 0
  %72 = vmatpush1.bf16.msra.mxu0 0
  %73 = vmatprep.subr.bf16.mxu0 0
  %74 = vmatpush1.bf16.msra.mxu0 0
  %75 = vmatprep.subr.bf16.mxu0 0
  %76 = vmatpush1.bf16.msra.mxu0 0
  %77 = vmatprep.subr.bf16.mxu0 0
  %78 = vmatpush1.bf16.msra.mxu0 0
  %79 = vmatprep.subr.bf16.mxu0 0
  %80 = vmatpush1.bf16.msra.mxu0 0
  %81 = vmatprep.subr.bf16.mxu0 0
  %82 = vmatpush1.bf16.msra.mxu0 0
  %83 = vmatprep.subr.bf16.mxu0 0
  %84 = vmatpush1.bf16.msra.mxu0 0
  %85 = vmatprep.subr.bf16.mxu0 0
  %86 = vmatpush1.bf16.msra.mxu0 0
  %87 = vmatprep.subr.bf16.mxu0 0
  %88 = vmatpush1.bf16.msra.mxu0 0
  %89 = vmatprep.mubr.bf16.mxu0 0
  %90 = vmatmul.mubr.bf16.gmra.mrb[0].mxu0 %v55
  %v91 = vpop.f32.mrb[0].mxu0
  %v92 = vadd.f32 %v39, %v91
  %v93 = vpop.f32.mrb[0].mxu0
  %v94 = vpop.f32.mrb[0].mxu0
  %v95 = vadd.f32 %v39, %v94
  %v96 = vpop.f32.mrb[0].mxu0
  %97 = vdwg.mxu0
  %v98 = vmul.f32 %v92, %v92
  %v99 = vmul.f32 %v95, %v95
  %v100 = vmul.f32 %v92, %v98
  %v101 = vmul.f32 %v95, %v99
  %v102 = vmul.f32 %v100, 0.044715
  %v103 = vmul.f32 %v101, 0.044715
  %v104 = vadd.f32 %v92, %v102
  %v105 = vadd.f32 %v95, %v103
  %v106 = vmul.f32 %v104, 0.7978846
  %v107 = vmul.f32 %v105, 0.7978846
  %v108 = vtanh.pop %v106
  %v109 = vtanh.pop %v107
  %v110 = vadd.f32 %v108, 1.0
  %v111 = vadd.f32 %v109, 1.0
  %v112 = vmul.f32 %v110, 0.5
  %v113 = vmul.f32 %v111, 0.5
  %v114 = vmul.f32 %v92, %v112
  %v115 = vmul.f32 %v95, %v113
  %v116 = vpack.c.bf16 %v115, %v114
  %v117 = vld [vmem:[%s3] sm:$0xf]
  %v118 = vld [vmem:[%s3 + $0x4] sm:$0xf]
  %v119 = vld [vmem:[%s3 + $0x8] sm:$0xf]
  %v120 = vld [vmem:[%s3 + $0xc] sm:$0xf]
  %v121 = vld [vmem:[%s3 + $0x10] sm:$0xf]
  %v122 = vld [vmem:[%s3 + $0x14] sm:$0xf]
  %v123 = vld [vmem:[%s3 + $0x18] sm:$0xf]
  %v124 = vld [vmem:[%s3 + $0x1c] sm:$0xf]
  %v125 = vld [vmem:[%s4] sm:$0x1]
  %v127 = vlaneseq
  %v128 = vshrl.u32 %v127, 7
  %v129 = vsub.s32 0, %v128
  %v130 = vrot.slane %v125, %v129
  %v140 = vunpack.c.l.b16 %v117
  %v141 = vunpack.c.l.b16 %v118
  %v142 = vunpack.c.l.b16 %v119
  %v143 = vunpack.c.l.b16 %v120
  %v144 = vunpack.c.l.b16 %v121
  %v145 = vunpack.c.l.b16 %v122
  %v146 = vunpack.c.l.b16 %v123
  %v147 = vunpack.c.l.b16 %v124
  %v148 = vpack.c.b16 %v141, %v140
  %v149 = vpack.c.b16 %v143, %v142
  %v150 = vpack.c.b16 %v145, %v144
  %v151 = vpack.c.b16 %v147, %v146
  %vm156 = vcmask 523264
  %v158 = vsel %vm156, %v116, 0
  %160 = vmatprep.subr.bf16.mxu0 0
  %161 = vmatpush1.bf16.msra.mxu0 %v148
  %162 = vmatprep.subr.bf16.mxu0 0
  %163 = vmatpush1.bf16.msra.mxu0 %v149
  %164 = vmatprep.subr.bf16.mxu0 0
  %165 = vmatpush1.bf16.msra.mxu0 %v150
  %166 = vmatprep.subr.bf16.mxu0 0
  %167 = vmatpush1.bf16.msra.mxu0 %v151
  %168 = vmatprep.subr.bf16.mxu0 0
  %169 = vmatpush1.bf16.msra.mxu0 0
  %170 = vmatprep.subr.bf16.mxu0 0
  %171 = vmatpush1.bf16.msra.mxu0 0
  %172 = vmatprep.subr.bf16.mxu0 0
  %173 = vmatpush1.bf16.msra.mxu0 0
  %174 = vmatprep.subr.bf16.mxu0 0
  %175 = vmatpush1.bf16.msra.mxu0 0
  %176 = vmatprep.subr.bf16.mxu0 0
  %177 = vmatpush1.bf16.msra.mxu0 0
  %178 = vmatprep.subr.bf16.mxu0 0
  %179 = vmatpush1.bf16.msra.mxu0 0
  %180 = vmatprep.subr.bf16.mxu0 0
  %181 = vmatpush1.bf16.msra.mxu0 0
  %182 = vmatprep.subr.bf16.mxu0 0
  %183 = vmatpush1.bf16.msra.mxu0 0
  %184 = vmatprep.subr.bf16.mxu0 0
  %185 = vmatpush1.bf16.msra.mxu0 0
  %186 = vmatprep.subr.bf16.mxu0 0
  %187 = vmatpush1.bf16.msra.mxu0 0
  %188 = vmatprep.subr.bf16.mxu0 0
  %189 = vmatpush1.bf16.msra.mxu0 0
  %190 = vmatprep.subr.bf16.mxu0 0
  %191 = vmatpush1.bf16.msra.mxu0 0
  %192 = vmatprep.mubr.bf16.mxu0 0
  %193 = vmatmul.mubr.bf16.gmra.mrb[0].mxu0 %v158
  %v194 = vpop.f32.mrb[0].mxu0
  %v195 = vadd.f32 %v130, %v194
  %v196 = vpop.f32.mrb[0].mxu0
  %v197 = vpop.f32.mrb[0].mxu0
  %v198 = vadd.f32 %v130, %v197
  %v199 = vpop.f32.mrb[0].mxu0
  %200 = vdwg.mxu0
  %v201 = vadd.f32 %v195, %v27
  %v202 = vadd.f32 %v198, %v28
  %v203 = vsel %vm53, %v201, 0.0
  %204 = vadd.xlane.f32.xlu0 %v203
  %v205 = vpop.xlane.xlu0 %204
  %v206 = vsel %vm53, %v202, 0.0
  %207 = vadd.xlane.f32.xlu0 %v206
  %v208 = vpop.xlane.xlu0 %207
  %v209 = vrcp.pop 32.0
  %v210 = vmul.f32 %v205, %v209
  %v211 = vmul.f32 %v208, %v209
  %v212 = vsub.f32 %v201, %v210
  %v213 = vsub.f32 %v202, %v211
  %v214 = vmul.f32 %v212, %v212
  %v215 = vmul.f32 %v213, %v213
  %v216 = vsel %vm53, %v214, 0.0
  %217 = vadd.xlane.f32.xlu0 %v216
  %v218 = vpop.xlane.xlu0 %217
  %v219 = vsel %vm53, %v215, 0.0
  %220 = vadd.xlane.f32.xlu0 %v219
  %v221 = vpop.xlane.xlu0 %220
  %v222 = vmul.f32 %v218, %v209
  %v223 = vmul.f32 %v221, %v209
  %v224 = vadd.f32 %v222, 1e-12
  %v225 = vadd.f32 %v223, 1e-12
  %v226 = vrsqrt.pop %v224
  %v227 = vrsqrt.pop %v225
  %v228 = vmul.f32 %v212, %v226
  %v229 = vmul.f32 %v213, %v227
  %v230 = vld [vmem:[%s5] sm:$0x1]
  %v232 = vlaneseq
  %v233 = vshrl.u32 %v232, 7
  %v234 = vsub.s32 0, %v233
  %v235 = vrot.slane %v230, %v234
  %v237 = vmul.f32 %v228, %v235
  %v238 = vmul.f32 %v229, %v235
  %v239 = vld [vmem:[%s6] sm:$0x1]
  %v241 = vlaneseq
  %v242 = vshrl.u32 %v241, 7
  %v243 = vsub.s32 0, %v242
  %v244 = vrot.slane %v239, %v243
  %v246 = vadd.f32 %v237, %v244
  %v247 = vadd.f32 %v238, %v244
  %248 = vst.msk [vmem:[%s7] sm:$0xff] %vm53, %v246
  %249 = vst.msk [vmem:[%s7 + $0x8] sm:$0xff] %vm53, %v247
  // Predicated region
  $region30: #{electra_for_spelling_check.8} parent=0 // pred_check
    _
  $region31: #{electra_for_spelling_check.8} parent=0 // pred_check_branch
    %251 = sbr.rel (0) target = $region33
  $region32: #{electra_for_spelling_check.8} parent=0 // pred_region
    _
  $region33: #{electra_for_spelling_check.8} parent=0 // pred_fallthru
    _
  // Predicated region
  $region34: #{electra_for_spelling_check.8} parent=0 // pred_check
    _
  $region35: #{electra_for_spelling_check.8} parent=0 // pred_check_branch
    %253 = sbr.rel (0) target = $region37
  $region36: #{electra_for_spelling_check.8} parent=0 // pred_region
    _
  $region37: #{electra_for_spelling_check.8} parent=0 // pred_fallthru
    _

// kernel: electra_for_spelling_check.7
$region0: #{electra_for_spelling_check.7}
  #allocation0 [shape = 'u32[]', space=smem, size = 0x4, offset = 0x4, fixed_abs, tag = 'smem constant byte address 0x4 - core index']
  #allocation1 [shape = 'u32[144,128]{1,0:T(1,128)}', space=vmem, size = 0x12000, scoped, tag = 'internal scratch']
  %s0 = inlined_call_operand.vmem [shape: f32[2,8,32], index: 0, kind: input, shape index: {}]
  %s1 = inlined_call_operand.vmem [shape: bf16[32,96], index: 1, kind: input, shape index: {}]
  %s2 = inlined_call_operand.vmem [shape: f32[1,96], index: 2, kind: input, shape index: {}]
  %s3 = inlined_call_operand.vmem [shape: bf16[32,32], index: 3, kind: input, shape index: {}]
  %s4 = inlined_call_operand.vmem [shape: f32[1,32], index: 4, kind: input, shape index: {}]
  %s5 = inlined_call_operand.vmem [shape: f32[1,32], index: 5, kind: input, shape index: {}]
  %s6 = inlined_call_operand.vmem [shape: f32[1,32], index: 6, kind: input, shape index: {}]
  %s7 = inlined_call_operand.vmem [shape: f32[2,1,8], index: 7, kind: input, shape index: {}]
  %s8 = inlined_call_operand.vmem [shape: f32[2,8,32], index: 8, kind: output, shape index: {}]
  %s9 = sld [smem:[#allocation0]]
  $region65: #{electra_for_spelling_check.7} parent=0
    _
  %s11 = ssub.s32 1, %s9
  %s12 = scalar_select 0, %s11, %s9
  loop: start=0, step=1, limit=4
  $region2: #{electra_for_spelling_check.7} parent=0 // loop_pre_header
    _
  $region3: #{electra_for_spelling_check.7} parent=0 // loop_header
    %s14 = sphi 0, %s18
    %p15 = scmp.ge.s32.totalorder %s14, 4
    %s24 = sphi 0, %s26
    %s27 = sphi 0, %s24
    %s28 = sphi 0, %s27
    %s44 = sphi 0, %s28
    %s48 = sphi 0, %s48
    %s50 = sphi 0, %s48
    %s51 = sphi 0, %s50
    %s65 = sphi 0, %s51
    %s69 = sphi 0, %s69
    %s71 = sphi 0, %s69
    %s72 = sphi 0, %s71
    %s86 = sphi 0, %s72
    %s90 = sphi 0, %s90
    %s92 = sphi 0, %s90
    %s93 = sphi 0, %s92
    %s107 = sphi 0, %s93
    %s111 = sphi 0, %s111
    %s113 = sphi 0, %s111
    %s114 = sphi 0, %s113
    %s128 = sphi 0, %s114
    %s132 = sphi 0, %s132
    %s134 = sphi 0, %s132
    %s135 = sphi 0, %s134
    %s149 = sphi 0, %s135
    %s153 = sphi 0, %s153
    %s155 = sphi 0, %s153
    %s156 = sphi 0, %s155
    %s170 = sphi 0, %s156
    %s176 = sphi 0, %s178
    %s179 = sphi 0, %s176
    %s180 = sphi 0, %s179
    %s196 = sphi 0, %s180
    %s202 = sphi 0, %s204
    %s205 = sphi 0, %s202
    %s206 = sphi 0, %s205
    %s222 = sphi 0, %s206
  $region4: #{electra_for_spelling_check.7} parent=0 // loop_header_branch
    %17 = sbr.rel (%p15) target = $region8
  $region5: #{electra_for_spelling_check.7} parent=0 // loop_body
    %s19 = ssub.s32 %s14, 1
    %s20 = ssub.s32 %s14, 2
    %s21 = sadd.s32 %s14, 1
    %s22 = ssub.s32 %s14, %s21
    %p23 = scmp.eq.s32.totalorder %s22, 0
    %s25 = sadd.s32 %s24, 1
    %s26 = scalar_select %p23, %s24, %s25
    %p29 = pneg %p23
    %p30 = scmp.eq.s32.totalorder %s14, 1
    %p31 = por %p29, %p30
    %p32 = scmp.ne.s32.totalorder %s24, %s27
    %p33 = scmp.eq.s32.totalorder %s14, 0
    %p34 = por %p32, %p33
    %p35 = scmp.ne.s32.totalorder %s24, %s27
    %p36 = scmp.eq.s32.totalorder %s19, 1
    %p37 = por %p35, %p36
    %p38 = scmp.ne.s32.totalorder %s27, %s28
    %p39 = scmp.eq.s32.totalorder %s19, 0
    %p40 = por %p38, %p39
    %p41 = scmp.ne.s32.totalorder %s27, %s28
    %p42 = scmp.eq.s32.totalorder %s20, 1
    %p43 = por %p41, %p42
    %p45 = scmp.ne.s32.totalorder %s28, %s44
    %p46 = scmp.eq.s32.totalorder %s20, 0
    %p47 = por %p45, %p46
    %s49 = sadd.s32 %s48, 1
    %p52 = scmp.eq.s32.totalorder %s14, 1
    %p53 = scmp.ne.s32.totalorder %s48, %s50
    %p54 = scmp.eq.s32.totalorder %s14, 0
    %p55 = por %p53, %p54
    %p56 = scmp.ne.s32.totalorder %s48, %s50
    %p57 = scmp.eq.s32.totalorder %s19, 1
    %p58 = por %p56, %p57
    %p59 = scmp.ne.s32.totalorder %s50, %s51
    %p60 = scmp.eq.s32.totalorder %s19, 0
    %p61 = por %p59, %p60
    %p62 = scmp.ne.s32.totalorder %s50, %s51
    %p63 = scmp.eq.s32.totalorder %s20, 1
    %p64 = por %p62, %p63
    %p66 = scmp.ne.s32.totalorder %s51, %s65
    %p67 = scmp.eq.s32.totalorder %s20, 0
    %p68 = por %p66, %p67
    %s70 = sadd.s32 %s69, 1
    %p73 = scmp.eq.s32.totalorder %s14, 1
    %p74 = scmp.ne.s32.totalorder %s69, %s71
    %p75 = scmp.eq.s32.totalorder %s14, 0
    %p76 = por %p74, %p75
    %p77 = scmp.ne.s32.totalorder %s69, %s71
    %p78 = scmp.eq.s32.totalorder %s19, 1
    %p79 = por %p77, %p78
    %p80 = scmp.ne.s32.totalorder %s71, %s72
    %p81 = scmp.eq.s32.totalorder %s19, 0
    %p82 = por %p80, %p81
    %p83 = scmp.ne.s32.totalorder %s71, %s72
    %p84 = scmp.eq.s32.totalorder %s20, 1
    %p85 = por %p83, %p84
    %p87 = scmp.ne.s32.totalorder %s72, %s86
    %p88 = scmp.eq.s32.totalorder %s20, 0
    %p89 = por %p87, %p88
    %s91 = sadd.s32 %s90, 1
    %p94 = scmp.eq.s32.totalorder %s14, 1
    %p95 = scmp.ne.s32.totalorder %s90, %s92
    %p96 = scmp.eq.s32.totalorder %s14, 0
    %p97 = por %p95, %p96
    %p98 = scmp.ne.s32.totalorder %s90, %s92
    %p99 = scmp.eq.s32.totalorder %s19, 1
    %p100 = por %p98, %p99
    %p101 = scmp.ne.s32.totalorder %s92, %s93
    %p102 = scmp.eq.s32.totalorder %s19, 0
    %p103 = por %p101, %p102
    %p104 = scmp.ne.s32.totalorder %s92, %s93
    %p105 = scmp.eq.s32.totalorder %s20, 1
    %p106 = por %p104, %p105
    %p108 = scmp.ne.s32.totalorder %s93, %s107
    %p109 = scmp.eq.s32.totalorder %s20, 0
    %p110 = por %p108, %p109
    %s112 = sadd.s32 %s111, 1
    %p115 = scmp.eq.s32.totalorder %s14, 1
    %p116 = scmp.ne.s32.totalorder %s111, %s113
    %p117 = scmp.eq.s32.totalorder %s14, 0
    %p118 = por %p116, %p117
    %p119 = scmp.ne.s32.totalorder %s111, %s113
    %p120 = scmp.eq.s32.totalorder %s19, 1
    %p121 = por %p119, %p120
    %p122 = scmp.ne.s32.totalorder %s113, %s114
    %p123 = scmp.eq.s32.totalorder %s19, 0
    %p124 = por %p122, %p123
    %p125 = scmp.ne.s32.totalorder %s113, %s114
    %p126 = scmp.eq.s32.totalorder %s20, 1
    %p127 = por %p125, %p126
    %p129 = scmp.ne.s32.totalorder %s114, %s128
    %p130 = scmp.eq.s32.totalorder %s20, 0
    %p131 = por %p129, %p130
    %s133 = sadd.s32 %s132, 1
    %p136 = scmp.eq.s32.totalorder %s14, 1
    %p137 = scmp.ne.s32.totalorder %s132, %s134
    %p138 = scmp.eq.s32.totalorder %s14, 0
    %p139 = por %p137, %p138
    %p140 = scmp.ne.s32.totalorder %s132, %s134
    %p141 = scmp.eq.s32.totalorder %s19, 1
    %p142 = por %p140, %p141
    %p143 = scmp.ne.s32.totalorder %s134, %s135
    %p144 = scmp.eq.s32.totalorder %s19, 0
    %p145 = por %p143, %p144
    %p146 = scmp.ne.s32.totalorder %s134, %s135
    %p147 = scmp.eq.s32.totalorder %s20, 1
    %p148 = por %p146, %p147
    %p150 = scmp.ne.s32.totalorder %s135, %s149
    %p151 = scmp.eq.s32.totalorder %s20, 0
    %p152 = por %p150, %p151
    %s154 = sadd.s32 %s153, 1
    %p157 = scmp.eq.s32.totalorder %s14, 1
    %p158 = scmp.ne.s32.totalorder %s153, %s155
    %p159 = scmp.eq.s32.totalorder %s14, 0
    %p160 = por %p158, %p159
    %p161 = scmp.ne.s32.totalorder %s153, %s155
    %p162 = scmp.eq.s32.totalorder %s19, 1
    %p163 = por %p161, %p162
    %p164 = scmp.ne.s32.totalorder %s155, %s156
    %p165 = scmp.eq.s32.totalorder %s19, 0
    %p166 = por %p164, %p165
    %p167 = scmp.ne.s32.totalorder %s155, %s156
    %p168 = scmp.eq.s32.totalorder %s20, 1
    %p169 = por %p167, %p168
    %p171 = scmp.ne.s32.totalorder %s156, %s170
    %p172 = scmp.eq.s32.totalorder %s20, 0
    %p173 = por %p171, %p172
    %s174 = ssub.s32 %s14, %s21
    %p175 = scmp.eq.s32.totalorder %s174, 0
    %s177 = sadd.s32 %s176, 1
    %s178 = scalar_select %p175, %s176, %s177
    %p181 = pneg %p175
    %p182 = scmp.eq.s32.totalorder %s14, 1
    %p183 = por %p181, %p182
    %p184 = scmp.ne.s32.totalorder %s176, %s179
    %p185 = scmp.eq.s32.totalorder %s14, 0
    %p186 = por %p184, %p185
    %p187 = scmp.ne.s32.totalorder %s176, %s179
    %p188 = scmp.eq.s32.totalorder %s19, 1
    %p189 = por %p187, %p188
    %p190 = scmp.ne.s32.totalorder %s179, %s180
    %p191 = scmp.eq.s32.totalorder %s19, 0
    %p192 = por %p190, %p191
    %p193 = scmp.ne.s32.totalorder %s179, %s180
    %p194 = scmp.eq.s32.totalorder %s20, 1
    %p195 = por %p193, %p194
    %p197 = scmp.ne.s32.totalorder %s180, %s196
    %p198 = scmp.eq.s32.totalorder %s20, 0
    %p199 = por %p197, %p198
    %s200 = ssub.s32 %s14, %s21
    %p201 = scmp.eq.s32.totalorder %s200, 0
    %s203 = sadd.s32 %s202, 1
    %s204 = scalar_select %p201, %s202, %s203
    %p207 = pneg %p201
    %p208 = scmp.eq.s32.totalorder %s14, 1
    %p209 = por %p207, %p208
    %p210 = scmp.ne.s32.totalorder %s202, %s205
    %p211 = scmp.eq.s32.totalorder %s14, 0
    %p212 = por %p210, %p211
    %p213 = scmp.ne.s32.totalorder %s202, %s205
    %p214 = scmp.eq.s32.totalorder %s19, 1
    %p215 = por %p213, %p214
    %p216 = scmp.ne.s32.totalorder %s205, %s206
    %p217 = scmp.eq.s32.totalorder %s19, 0
    %p218 = por %p216, %p217
    %p219 = scmp.ne.s32.totalorder %s205, %s206
    %p220 = scmp.eq.s32.totalorder %s20, 1
    %p221 = por %p219, %p220
    %p223 = scmp.ne.s32.totalorder %s206, %s222
    %p224 = scmp.eq.s32.totalorder %s20, 0
    %p225 = por %p223, %p224
    %p226 = scmp.le.s32.totalorder 1, %s14
    %p227 = scmp.lt.s32.totalorder %s14, 3
    %p228 = pnand %p226, %p227
    %p229 = pneg %p228
    // Predicated region
    $region9: #{electra_for_spelling_check.7} parent=5 // pred_check
      _
    $region10: #{electra_for_spelling_check.7} parent=5 // pred_check_branch
      %231 = sbr.rel (%p228) target = $region12
    $region11: #{electra_for_spelling_check.7} parent=5 // pred_region
      %s232 = ssub.s32 %s14, 1
      // Predicated region
      $region13: #{electra_for_spelling_check.7} parent=11 // pred_check
        %p233 = pneg %p61
      $region14: #{electra_for_spelling_check.7} parent=11 // pred_check_branch
        %235 = sbr.rel (%p233) target = $region16
      $region15: #{electra_for_spelling_check.7} parent=11 // pred_region
        _
      $region16: #{electra_for_spelling_check.7} parent=11 // pred_fallthru
        _
      // Predicated region
      $region17: #{electra_for_spelling_check.7} parent=11 // pred_check
        %p236 = pneg %p82
      $region18: #{electra_for_spelling_check.7} parent=11 // pred_check_branch
        %238 = sbr.rel (%p236) target = $region20
      $region19: #{electra_for_spelling_check.7} parent=11 // pred_region
        _
      $region20: #{electra_for_spelling_check.7} parent=11 // pred_fallthru
        _
      // Predicated region
      $region21: #{electra_for_spelling_check.7} parent=11 // pred_check
        %p239 = pneg %p103
      $region22: #{electra_for_spelling_check.7} parent=11 // pred_check_branch
        %241 = sbr.rel (%p239) target = $region24
      $region23: #{electra_for_spelling_check.7} parent=11 // pred_region
        _
      $region24: #{electra_for_spelling_check.7} parent=11 // pred_fallthru
        _
      // Predicated region
      $region25: #{electra_for_spelling_check.7} parent=11 // pred_check
        %p242 = pneg %p124
      $region26: #{electra_for_spelling_check.7} parent=11 // pred_check_branch
        %244 = sbr.rel (%p242) target = $region28
      $region27: #{electra_for_spelling_check.7} parent=11 // pred_region
        _
      $region28: #{electra_for_spelling_check.7} parent=11 // pred_fallthru
        _
      // Predicated region
      $region29: #{electra_for_spelling_check.7} parent=11 // pred_check
        %p245 = pneg %p145
      $region30: #{electra_for_spelling_check.7} parent=11 // pred_check_branch
        %247 = sbr.rel (%p245) target = $region32
      $region31: #{electra_for_spelling_check.7} parent=11 // pred_region
        _
      $region32: #{electra_for_spelling_check.7} parent=11 // pred_fallthru
        _
      // Predicated region
      $region33: #{electra_for_spelling_check.7} parent=11 // pred_check
        %p248 = pneg %p166
      $region34: #{electra_for_spelling_check.7} parent=11 // pred_check_branch
        %250 = sbr.rel (%p248) target = $region36
      $region35: #{electra_for_spelling_check.7} parent=11 // pred_region
        _
      $region36: #{electra_for_spelling_check.7} parent=11 // pred_fallthru
        _
    $region12: #{electra_for_spelling_check.7} parent=5 // pred_fallthru
      _
    %p251 = scmp.lt.s32.totalorder %s14, 2
    // Predicated region
    $region37: #{electra_for_spelling_check.7} parent=5 // pred_check
      %p252 = pneg %p251
    $region38: #{electra_for_spelling_check.7} parent=5 // pred_check_branch
      %254 = sbr.rel (%p252) target = $region40
    $region39: #{electra_for_spelling_check.7} parent=5 // pred_region
      // Predicated region
      $region41: #{electra_for_spelling_check.7} parent=39 // pred_check
        %p255 = pneg %p34
      $region42: #{electra_for_spelling_check.7} parent=39 // pred_check_branch
        %257 = sbr.rel (%p255) target = $region44
      $region43: #{electra_for_spelling_check.7} parent=39 // pred_region
        %p258 = scmp.lt.s32.totalorder %s14, 1
        %s259 = scalar_select %p258, %s14, 1
        %s260 = smul.addr %s259, 8
        %s261 = scalar_lea.vmem %s0, %s260
      $region44: #{electra_for_spelling_check.7} parent=39 // pred_fallthru
        _
      // Predicated region
      $region45: #{electra_for_spelling_check.7} parent=39 // pred_check
        %p262 = pneg %p186
      $region46: #{electra_for_spelling_check.7} parent=39 // pred_check_branch
        %264 = sbr.rel (%p262) target = $region48
      $region47: #{electra_for_spelling_check.7} parent=39 // pred_region
        %p265 = scmp.lt.s32.totalorder %s14, 1
        %s266 = scalar_select %p265, %s14, 1
        %s267 = scalar_lea.vmem %s7, %s266
      $region48: #{electra_for_spelling_check.7} parent=39 // pred_fallthru
        _
    $region40: #{electra_for_spelling_check.7} parent=5 // pred_fallthru
      _
    %p268 = scmp.le.s32.totalorder 1, %s14
    %p269 = scmp.lt.s32.totalorder %s14, 3
    %p270 = pnand %p268, %p269
    %p271 = pneg %p270
    // Predicated region
    $region49: #{electra_for_spelling_check.7} parent=5 // pred_check
      _
    $region50: #{electra_for_spelling_check.7} parent=5 // pred_check_branch
      %273 = sbr.rel (%p270) target = $region52
    $region51: #{electra_for_spelling_check.7} parent=5 // pred_region
      %s274 = ssub.s32 %s14, 1
      %p275 = scmp.lt.s32.totalorder %s19, 1
      %s276 = scalar_select %p275, %s19, 1
      %s277 = smul.addr %s276, 8
      %s278 = scalar_lea.vmem %s0, %s277
      %p279 = pneg %p40
      %p280 = pneg %p37
      %p281 = pneg %p61
      %p282 = pneg %p58
      %p283 = pneg %p82
      %p284 = pneg %p79
      %p285 = pneg %p103
      %p286 = pneg %p100
      %p287 = pneg %p124
      %p288 = pneg %p121
      %p289 = pneg %p145
      %p290 = pneg %p142
      %p291 = pneg %p166
      %p292 = pneg %p163
      %p293 = scmp.lt.s32.totalorder %s19, 1
      %s294 = scalar_select %p293, %s19, 1
      %s295 = scalar_lea.vmem %s7, %s294
      %p296 = pneg %p192
      %p297 = pneg %p189
      %p298 = pneg %p218
      %p299 = pneg %p215
      %p300 = scmp.lt.s32.totalorder %s19, 1
      %s301 = scalar_select %p300, %s19, 1
      %s302 = smul.addr %s301, 8
      %s303 = scalar_lea.vmem %s8, %s302
      %p304 = scmp.lt.s32.totalorder %s19, 1
      %s305 = scalar_select %p304, %s19, 1
      %s306 = smul.addr %s305, 8
      %s307 = scalar_lea.vmem %s0, %s306
      %p308 = scmp.lt.s32.totalorder %s19, 1
      %s309 = scalar_select %p308, %s19, 1
      %s310 = scalar_lea.vmem %s7, %s309
      %p311 = scmp.lt.s32.totalorder %s19, 1
      %s312 = scalar_select %p311, %s19, 1
      %s313 = smul.addr %s312, 8
      %s314 = scalar_lea.vmem %s8, %s313
      %v316 = vld [vmem:[%s307] sm:$0xff]
      %v317 = vpack.c.bf16 %v316, %v316
      %v318 = vld [vmem:[%s1] sm:$0xf]
      %v319 = vld [vmem:[%s1 + $0x4] sm:$0xf]
      %v320 = vld [vmem:[%s1 + $0x8] sm:$0xf]
      %v321 = vld [vmem:[%s1 + $0xc] sm:$0xf]
      %v322 = vld [vmem:[%s2] sm:$0x1]
      %v324 = vlaneseq
      %v325 = vshrl.u32 %v324, 7
      %v326 = vsub.s32 0, %v325
      %v327 = vrot.slane %v322, %v326
      %v333 = vunpack.c.l.b16 %v318
      %v334 = vunpack.c.l.b16 %v319
      %v335 = vunpack.c.l.b16 %v320
      %v336 = vunpack.c.l.b16 %v321
      %v337 = vpack.c.b16 %v334, %v333
      %v338 = vpack.c.b16 %v336, %v335
      %vm341 = vcmask 261120
      %v343 = vsel %vm341, %v317, 0
      %345 = vmatprep.subr.bf16.mxu0 0
      %346 = vmatpush1.bf16.msra.mxu0 %v337
      %347 = vmatprep.subr.bf16.mxu0 0
      %348 = vmatpush1.bf16.msra.mxu0 %v338
      %349 = vmatprep.subr.bf16.mxu0 0
      %350 = vmatpush1.bf16.msra.mxu0 0
      %351 = vmatprep.subr.bf16.mxu0 0
      %352 = vmatpush1.bf16.msra.mxu0 0
      %353 = vmatprep.subr.bf16.mxu0 0
      %354 = vmatpush1.bf16.msra.mxu0 0
      %355 = vmatprep.subr.bf16.mxu0 0
      %356 = vmatpush1.bf16.msra.mxu0 0
      %357 = vmatprep.subr.bf16.mxu0 0
      %358 = vmatpush1.bf16.msra.mxu0 0
      %359 = vmatprep.subr.bf16.mxu0 0
      %360 = vmatpush1.bf16.msra.mxu0 0
      %361 = vmatprep.subr.bf16.mxu0 0
      %362 = vmatpush1.bf16.msra.mxu0 0
      %363 = vmatprep.subr.bf16.mxu0 0
      %364 = vmatpush1.bf16.msra.mxu0 0
      %365 = vmatprep.subr.bf16.mxu0 0
      %366 = vmatpush1.bf16.msra.mxu0 0
      %367 = vmatprep.subr.bf16.mxu0 0
      %368 = vmatpush1.bf16.msra.mxu0 0
      %369 = vmatprep.subr.bf16.mxu0 0
      %370 = vmatpush1.bf16.msra.mxu0 0
      %371 = vmatprep.subr.bf16.mxu0 0
      %372 = vmatpush1.bf16.msra.mxu0 0
      %373 = vmatprep.subr.bf16.mxu0 0
      %374 = vmatpush1.bf16.msra.mxu0 0
      %375 = vmatprep.subr.bf16.mxu0 0
      %376 = vmatpush1.bf16.msra.mxu0 0
      %377 = vmatprep.mubr.bf16.mxu0 0
      %378 = vmatmul.mubr.bf16.gmra.mrb[0].mxu0 %v343
      %v379 = vpop.f32.mrb[0].mxu0
      %v380 = vadd.f32 %v327, %v379
      %v381 = vpop.f32.mrb[0].mxu0
      %v382 = vpop.f32.mrb[0].mxu0
      %v383 = vpop.f32.mrb[0].mxu0
      %384 = vdwg.mxu0
      %v385 = vld [vmem:[%s310] sm:$0x1]
      %v386 = vpack.c.bf16 %v380, %v380
      %388 = vrot.lane.b32.xlu0 %v386, 96
      %v389 = vpop.permute.xlu0 %388
      %vm390 = vcmask 130048
      %v392 = vsel %vm390, %v386, 0
      %v395 = vsel %vm390, %v389, 0
      %397 = vmatprep.subr.bf16.mxu0 0
      %398 = vmatpush1.bf16.xpose.msra.mxu0 %v395
      %399 = vmatprep.subr.bf16.mxu0 0
      %400 = vmatpush1.bf16.xpose.msra.mxu0 0
      %401 = vmatprep.subr.bf16.mxu0 0
      %402 = vmatpush1.bf16.xpose.msra.mxu0 0
      %403 = vmatprep.subr.bf16.mxu0 0
      %404 = vmatpush1.bf16.xpose.msra.mxu0 0
      %405 = vmatprep.subr.bf16.mxu0 0
      %406 = vmatpush1.bf16.xpose.msra.mxu0 0
      %407 = vmatprep.subr.bf16.mxu0 0
      %408 = vmatpush1.bf16.xpose.msra.mxu0 0
      %409 = vmatprep.subr.bf16.mxu0 0
      %410 = vmatpush1.bf16.xpose.msra.mxu0 0
      %411 = vmatprep.subr.bf16.mxu0 0
      %412 = vmatpush1.bf16.xpose.msra.mxu0 0
      %413 = vmatprep.subr.bf16.mxu0 0
      %414 = vmatpush1.bf16.xpose.msra.mxu0 0
      %415 = vmatprep.subr.bf16.mxu0 0
      %416 = vmatpush1.bf16.xpose.msra.mxu0 0
      %417 = vmatprep.subr.bf16.mxu0 0
      %418 = vmatpush1.bf16.xpose.msra.mxu0 0
      %419 = vmatprep.subr.bf16.mxu0 0
      %420 = vmatpush1.bf16.xpose.msra.mxu0 0
      %421 = vmatprep.subr.bf16.mxu0 0
      %422 = vmatpush1.bf16.xpose.msra.mxu0 0
      %423 = vmatprep.subr.bf16.mxu0 0
      %424 = vmatpush1.bf16.xpose.msra.mxu0 0
      %425 = vmatprep.subr.bf16.mxu0 0
      %426 = vmatpush1.bf16.xpose.msra.mxu0 0
      %427 = vmatprep.subr.bf16.mxu0 0
      %428 = vmatpush1.bf16.xpose.msra.mxu0 0
      %429 = vmatprep.mubr.bf16.mxu0 0
      %430 = vmatmul.mubr.bf16.gmra.mrb[0].mxu0 %v392
      %v431 = vpop.f32.mrb[0].mxu0
      %v432 = vadd.f32 0.0, %v431
      %v433 = vpop.f32.mrb[0].mxu0
      %v434 = vpop.f32.mrb[0].mxu0
      %v435 = vpop.f32.mrb[0].mxu0
      %436 = vdwg.mxu0
      %v437 = vmul.f32 %v432, 0.25
      %v439 = vlaneseq
      %v440 = vshrl.u32 %v439, 7
      %v441 = vsub.s32 0, %v440
      %v442 = vrot.slane %v385, %v441
      %v444 = vadd.f32 %v437, %v442
      %vm445 = vcmask 64512
      %v446 = vsel %vm445, %v444, -inf
      %447 = vmax.xlane.f32.xlu0 %v446
      %v448 = vpop.xlane.xlu0 %447
      %v449 = vsub.f32 %v444, %v448
      %v450 = vmul.f32 %v449, 1.442695
      %v451 = vpow.pop %v450
      %v452 = vsel %vm445, %v451, 0.0
      %453 = vadd.xlane.f32.xlu0 %v452
      %v454 = vpop.xlane.xlu0 %453
      %v455 = vrcp.pop %v454
      %v456 = vmul.f32 %v451, %v455
      %v457 = vpack.c.bf16 %v456, %v456
      %458 = vrot.lane.b32.xlu0 %v386, 64
      %v459 = vpop.permute.xlu0 %458
      %v461 = vsel %vm445, %v457, 0
      %vm463 = vcmask 1043456
      %v465 = vsel %vm463, %v459, 0
      %467 = vmatprep.subr.bf16.mxu0 0
      %468 = vmatpush1.bf16.msra.mxu0 %v465
      %469 = vmatprep.subr.bf16.mxu0 0
      %470 = vmatpush1.bf16.msra.mxu0 0
      %471 = vmatprep.subr.bf16.mxu0 0
      %472 = vmatpush1.bf16.msra.mxu0 0
      %473 = vmatprep.subr.bf16.mxu0 0
      %474 = vmatpush1.bf16.msra.mxu0 0
      %475 = vmatprep.subr.bf16.mxu0 0
      %476 = vmatpush1.bf16.msra.mxu0 0
      %477 = vmatprep.subr.bf16.mxu0 0
      %478 = vmatpush1.bf16.msra.mxu0 0
      %479 = vmatprep.subr.bf16.mxu0 0
      %480 = vmatpush1.bf16.msra.mxu0 0
      %481 = vmatprep.subr.bf16.mxu0 0
      %482 = vmatpush1.bf16.msra.mxu0 0
      %483 = vmatprep.subr.bf16.mxu0 0
      %484 = vmatpush1.bf16.msra.mxu0 0
      %485 = vmatprep.subr.bf16.mxu0 0
      %486 = vmatpush1.bf16.msra.mxu0 0
      %487 = vmatprep.subr.bf16.mxu0 0
      %488 = vmatpush1.bf16.msra.mxu0 0
      %489 = vmatprep.subr.bf16.mxu0 0
      %490 = vmatpush1.bf16.msra.mxu0 0
      %491 = vmatprep.subr.bf16.mxu0 0
      %492 = vmatpush1.bf16.msra.mxu0 0
      %493 = vmatprep.subr.bf16.mxu0 0
      %494 = vmatpush1.bf16.msra.mxu0 0
      %495 = vmatprep.subr.bf16.mxu0 0
      %496 = vmatpush1.bf16.msra.mxu0 0
      %497 = vmatprep.subr.bf16.mxu0 0
      %498 = vmatpush1.bf16.msra.mxu0 0
      %499 = vmatprep.mubr.bf16.mxu0 0
      %500 = vmatmul.mubr.bf16.gmra.mrb[0].mxu0 %v461
      %v501 = vpop.f32.mrb[0].mxu0
      %v502 = vadd.f32 0.0, %v501
      %v503 = vpop.f32.mrb[0].mxu0
      %v504 = vpop.f32.mrb[0].mxu0
      %v505 = vpop.f32.mrb[0].mxu0
      %506 = vdwg.mxu0
      %507 = vrot.lane.b32.xlu0 %v386, 112
      %v508 = vpop.permute.xlu0 %507
      %509 = vrot.lane.b32.xlu0 %v386, 80
      %v510 = vpop.permute.xlu0 %509
      %v512 = vsel %vm390, %v508, 0
      %v515 = vsel %vm390, %v510, 0
      %517 = vmatprep.subr.bf16.mxu0 0
      %518 = vmatpush1.bf16.xpose.msra.mxu0 %v515
      %519 = vmatprep.subr.bf16.mxu0 0
      %520 = vmatpush1.bf16.xpose.msra.mxu0 0
      %521 = vmatprep.subr.bf16.mxu0 0
      %522 = vmatpush1.bf16.xpose.msra.mxu0 0
      %523 = vmatprep.subr.bf16.mxu0 0
      %524 = vmatpush1.bf16.xpose.msra.mxu0 0
      %525 = vmatprep.subr.bf16.mxu0 0
      %526 = vmatpush1.bf16.xpose.msra.mxu0 0
      %527 = vmatprep.subr.bf16.mxu0 0
      %528 = vmatpush1.bf16.xpose.msra.mxu0 0
      %529 = vmatprep.subr.bf16.mxu0 0
      %530 = vmatpush1.bf16.xpose.msra.mxu0 0
      %531 = vmatprep.subr.bf16.mxu0 0
      %532 = vmatpush1.bf16.xpose.msra.mxu0 0
      %533 = vmatprep.subr.bf16.mxu0 0
      %534 = vmatpush1.bf16.xpose.msra.mxu0 0
      %535 = vmatprep.subr.bf16.mxu0 0
      %536 = vmatpush1.bf16.xpose.msra.mxu0 0
      %537 = vmatprep.subr.bf16.mxu0 0
      %538 = vmatpush1.bf16.xpose.msra.mxu0 0
      %539 = vmatprep.subr.bf16.mxu0 0
      %540 = vmatpush1.bf16.xpose.msra.mxu0 0
      %541 = vmatprep.subr.bf16.mxu0 0
      %542 = vmatpush1.bf16.xpose.msra.mxu0 0
      %543 = vmatprep.subr.bf16.mxu0 0
      %544 = vmatpush1.bf16.xpose.msra.mxu0 0
      %545 = vmatprep.subr.bf16.mxu0 0
      %546 = vmatpush1.bf16.xpose.msra.mxu0 0
      %547 = vmatprep.subr.bf16.mxu0 0
      %548 = vmatpush1.bf16.xpose.msra.mxu0 0
      %549 = vmatprep.mubr.bf16.mxu0 0
      %550 = vmatmul.mubr.bf16.gmra.mrb[0].mxu0 %v512
      %v551 = vpop.f32.mrb[0].mxu0
      %v552 = vadd.f32 0.0, %v551
      %v553 = vpop.f32.mrb[0].mxu0
      %v554 = vpop.f32.mrb[0].mxu0
      %v555 = vpop.f32.mrb[0].mxu0
      %556 = vdwg.mxu0
      %v557 = vmul.f32 %v552, 0.25
      %v558 = vadd.f32 %v557, %v442
      %v559 = vsel %vm445, %v558, -inf
      %560 = vmax.xlane.f32.xlu0 %v559
      %v561 = vpop.xlane.xlu0 %560
      %v562 = vsub.f32 %v558, %v561
      %v563 = vmul.f32 %v562, 1.442695
      %v564 = vpow.pop %v563
      %v565 = vsel %vm445, %v564, 0.0
      %566 = vadd.xlane.f32.xlu0 %v565
      %v567 = vpop.xlane.xlu0 %566
      %v568 = vrcp.pop %v567
      %v569 = vmul.f32 %v564, %v568
      %v570 = vpack.c.bf16 %v569, %v569
      %571 = vrot.lane.b32.xlu0 %v386, 48
      %v572 = vpop.permute.xlu0 %571
      %v574 = vsel %vm445, %v570, 0
      %v577 = vsel %vm463, %v572, 0
      %579 = vmatprep.subr.bf16.mxu0 0
      %580 = vmatpush1.bf16.msra.mxu0 %v577
      %581 = vmatprep.subr.bf16.mxu0 0
      %582 = vmatpush1.bf16.msra.mxu0 0
      %583 = vmatprep.subr.bf16.mxu0 0
      %584 = vmatpush1.bf16.msra.mxu0 0
      %585 = vmatprep.subr.bf16.mxu0 0
      %586 = vmatpush1.bf16.msra.mxu0 0
      %587 = vmatprep.subr.bf16.mxu0 0
      %588 = vmatpush1.bf16.msra.mxu0 0
      %589 = vmatprep.subr.bf16.mxu0 0
      %590 = vmatpush1.bf16.msra.mxu0 0
      %591 = vmatprep.subr.bf16.mxu0 0
      %592 = vmatpush1.bf16.msra.mxu0 0
      %593 = vmatprep.subr.bf16.mxu0 0
      %594 = vmatpush1.bf16.msra.mxu0 0
      %595 = vmatprep.subr.bf16.mxu0 0
      %596 = vmatpush1.bf16.msra.mxu0 0
      %597 = vmatprep.subr.bf16.mxu0 0
      %598 = vmatpush1.bf16.msra.mxu0 0
      %599 = vmatprep.subr.bf16.mxu0 0
      %600 = vmatpush1.bf16.msra.mxu0 0
      %601 = vmatprep.subr.bf16.mxu0 0
      %602 = vmatpush1.bf16.msra.mxu0 0
      %603 = vmatprep.subr.bf16.mxu0 0
      %604 = vmatpush1.bf16.msra.mxu0 0
      %605 = vmatprep.subr.bf16.mxu0 0
      %606 = vmatpush1.bf16.msra.mxu0 0
      %607 = vmatprep.subr.bf16.mxu0 0
      %608 = vmatpush1.bf16.msra.mxu0 0
      %609 = vmatprep.subr.bf16.mxu0 0
      %610 = vmatpush1.bf16.msra.mxu0 0
      %611 = vmatprep.mubr.bf16.mxu0 0
      %612 = vmatmul.mubr.bf16.gmra.mrb[0].mxu0 %v574
      %v613 = vpop.f32.mrb[0].mxu0
      %v614 = vadd.f32 0.0, %v613
      %v615 = vpop.f32.mrb[0].mxu0
      %v616 = vpop.f32.mrb[0].mxu0
      %v617 = vpop.f32.mrb[0].mxu0
      %618 = vdwg.mxu0
      %620 = vrot.lane.b32.xlu0 %v614, 16
      %v621 = vpop.permute.xlu0 %620
      %v623 = vsel %vm390, %v502, %v621
      %v624 = vpack.c.bf16 %v623, %v623
      %v625 = vld [vmem:[%s3] sm:$0xf]
      %v626 = vld [vmem:[%s3 + $0x4] sm:$0xf]
      %v627 = vld [vmem:[%s3 + $0x8] sm:$0xf]
      %v628 = vld [vmem:[%s3 + $0xc] sm:$0xf]
      %v629 = vld [vmem:[%s4] sm:$0x1]
      %v631 = vlaneseq
      %v632 = vshrl.u32 %v631, 7
      %v633 = vsub.s32 0, %v632
      %v634 = vrot.slane %v629, %v633
      %v640 = vunpack.c.l.b16 %v625
      %v641 = vunpack.c.l.b16 %v626
      %v642 = vunpack.c.l.b16 %v627
      %v643 = vunpack.c.l.b16 %v628
      %v644 = vpack.c.b16 %v641, %v640
      %v645 = vpack.c.b16 %v643, %v642
      %v649 = vsel %vm341, %v624, 0
      %651 = vmatprep.subr.bf16.mxu0 0
      %652 = vmatpush1.bf16.msra.mxu0 %v644
      %653 = vmatprep.subr.bf16.mxu0 0
      %654 = vmatpush1.bf16.msra.mxu0 %v645
      %655 = vmatprep.subr.bf16.mxu0 0
      %656 = vmatpush1.bf16.msra.mxu0 0
      %657 = vmatprep.subr.bf16.mxu0 0
      %658 = vmatpush1.bf16.msra.mxu0 0
      %659 = vmatprep.subr.bf16.mxu0 0
      %660 = vmatpush1.bf16.msra.mxu0 0
      %661 = vmatprep.subr.bf16.mxu0 0
      %662 = vmatpush1.bf16.msra.mxu0 0
      %663 = vmatprep.subr.bf16.mxu0 0
      %664 = vmatpush1.bf16.msra.mxu0 0
      %665 = vmatprep.subr.bf16.mxu0 0
      %666 = vmatpush1.bf16.msra.mxu0 0
      %667 = vmatprep.subr.bf16.mxu0 0
      %668 = vmatpush1.bf16.msra.mxu0 0
      %669 = vmatprep.subr.bf16.mxu0 0
      %670 = vmatpush1.bf16.msra.mxu0 0
      %671 = vmatprep.subr.bf16.mxu0 0
      %672 = vmatpush1.bf16.msra.mxu0 0
      %673 = vmatprep.subr.bf16.mxu0 0
      %674 = vmatpush1.bf16.msra.mxu0 0
      %675 = vmatprep.subr.bf16.mxu0 0
      %676 = vmatpush1.bf16.msra.mxu0 0
      %677 = vmatprep.subr.bf16.mxu0 0
      %678 = vmatpush1.bf16.msra.mxu0 0
      %679 = vmatprep.subr.bf16.mxu0 0
      %680 = vmatpush1.bf16.msra.mxu0 0
      %681 = vmatprep.subr.bf16.mxu0 0
      %682 = vmatpush1.bf16.msra.mxu0 0
      %683 = vmatprep.mubr.bf16.mxu0 0
      %684 = vmatmul.mubr.bf16.gmra.mrb[0].mxu0 %v649
      %v685 = vpop.f32.mrb[0].mxu0
      %v686 = vadd.f32 %v634, %v685
      %v687 = vpop.f32.mrb[0].mxu0
      %v688 = vpop.f32.mrb[0].mxu0
      %v689 = vpop.f32.mrb[0].mxu0
      %690 = vdwg.mxu0
      %v691 = vadd.f32 %v686, %v316
      %v692 = vsel %vm341, %v691, 0.0
      %693 = vadd.xlane.f32.xlu0 %v692
      %v694 = vpop.xlane.xlu0 %693
      %v695 = vrcp.pop 32.0
      %v696 = vmul.f32 %v694, %v695
      %v697 = vsub.f32 %v691, %v696
      %v698 = vmul.f32 %v697, %v697
      %v699 = vsel %vm341, %v698, 0.0
      %700 = vadd.xlane.f32.xlu0 %v699
      %v701 = vpop.xlane.xlu0 %700
      %v702 = vmul.f32 %v701, %v695
      %v703 = vadd.f32 %v702, 1e-12
      %v704 = vrsqrt.pop %v703
      %v705 = vmul.f32 %v697, %v704
      %v706 = vld [vmem:[%s5] sm:$0x1]
      %v708 = vlaneseq
      %v709 = vshrl.u32 %v708, 7
      %v710 = vsub.s32 0, %v709
      %v711 = vrot.slane %v706, %v710
      %v713 = vmul.f32 %v705, %v711
      %v714 = vld [vmem:[%s6] sm:$0x1]
      %v716 = vlaneseq
      %v717 = vshrl.u32 %v716, 7
      %v718 = vsub.s32 0, %v717
      %v719 = vrot.slane %v714, %v718
      %v721 = vadd.f32 %v713, %v719
      %722 = vst.msk [vmem:[%s314] sm:$0xff] %vm341, %v721
      %p723 = scmp.lt.s32.totalorder %s19, 1
      %s724 = scalar_select %p723, %s19, 1
      %s725 = smul.addr %s724, 8
      %s726 = scalar_lea.vmem %s8, %s725
      // Predicated region
      $region53: #{electra_for_spelling_check.7} parent=51 // pred_check
        %p727 = pneg %p215
      $region54: #{electra_for_spelling_check.7} parent=51 // pred_check_branch
        %729 = sbr.rel (%p727) target = $region56
      $region55: #{electra_for_spelling_check.7} parent=51 // pred_region
        _
      $region56: #{electra_for_spelling_check.7} parent=51 // pred_fallthru
        _
    $region52: #{electra_for_spelling_check.7} parent=5 // pred_fallthru
      _
    %p730 = scmp.le.s32.totalorder 2, %s14
    // Predicated region
    $region57: #{electra_for_spelling_check.7} parent=5 // pred_check
      %p731 = pneg %p730
    $region58: #{electra_for_spelling_check.7} parent=5 // pred_check_branch
      %733 = sbr.rel (%p731) target = $region60
    $region59: #{electra_for_spelling_check.7} parent=5 // pred_region
      %s734 = ssub.s32 %s14, 2
      // Predicated region
      $region61: #{electra_for_spelling_check.7} parent=59 // pred_check
        %p735 = pneg %p221
      $region62: #{electra_for_spelling_check.7} parent=59 // pred_check_branch
        %737 = sbr.rel (%p735) target = $region64
      $region63: #{electra_for_spelling_check.7} parent=59 // pred_region
        %p738 = scmp.lt.s32.totalorder %s20, 1
        %s739 = scalar_select %p738, %s20, 1
        %s740 = smul.addr %s739, 8
        %s741 = scalar_lea.vmem %s8, %s740
      $region64: #{electra_for_spelling_check.7} parent=59 // pred_fallthru
        _
    $region60: #{electra_for_spelling_check.7} parent=5 // pred_fallthru
      _
  $region6: #{electra_for_spelling_check.7} parent=0 // loop_footer
    %s18 = sadd.s32 1, %s14
  $region7: #{electra_for_spelling_check.7} parent=0 // loop_footer_branch
    %13 = sbr.rel target = $region3
  $region8: #{electra_for_spelling_check.7} parent=0 // loop_exit
    _

</llo_original>
